<compile_context>
chip_gen: v5e
topology: v5e:2x2
jax: 0.10.0
libtpu: 0.0.40
codegen_flags: <defaults>
</compile_context>

<pallas_src>
import functools

import jax
import jax.numpy as jnp
from jax.experimental import pallas as pl
from jax.experimental.pallas import tpu as pltpu

HIDDEN = 32         # hidden_size
NUM_CLASS = 8       # numClass
OUT_PAD = 128       # lane-dense output width (NUM_CLASS padded to a full lane extent)
BATCH = 2
IN_CH = 3
IMG = 32            # conv1 kernel size == 32 -> requires 32x32 input (CIFAR-like)
K = IN_CH * IMG * IMG
BN_EPS = 1e-5
N_RES_STEPS = 5


def net3fcbrc_kernel(x_ref, w1_ref, b1_ref, w2_ref, wfc_ref, bfc_ref, o_ref):
    # x_ref: (TB, K)  w1_ref: (K, H)  b1_ref: (1, H)
    # w2_ref: (H, H)  wfc_ref: (H, OUT_PAD)  bfc_ref: (1, OUT_PAD)
    # o_ref: (TB, OUT_PAD)

    # conv1_sub: Conv2d(3, H, 32) over a 32x32 image == flattened matmul + bias.
    x = jnp.dot(x_ref[...], w1_ref[...],
                preferred_element_type=jnp.float32) + b1_ref[...]

    mm_dtype = w2_ref.dtype  # bf16 on the low-precision path, f32 otherwise.

    # 5 residual steps: x = 0.1 * BN(Conv1x1(relu(x))) + x
    # conv2_sub's bias is dropped: BatchNorm2d(affine=False) subtracts the
    # batch mean, which cancels any per-channel constant exactly (no-op).
    for _ in range(N_RES_STEPS):
        h = jnp.maximum(x, 0.0).astype(mm_dtype)
        y = jnp.dot(h, w2_ref[...], preferred_element_type=jnp.float32)
        # BatchNorm2d(affine=False), training-mode batch stats (biased var).
        # Stats over N*H*W = batch rows (spatial is 1x1).
        mean = jnp.mean(y, axis=0, keepdims=True)
        centered = y - mean
        var = jnp.mean(centered * centered, axis=0, keepdims=True)
        # Fold the 0.1 residual scale into the normalization factor (EUP rsqrt).
        inv = jax.lax.rsqrt(var + BN_EPS) * 0.1
        x = centered * inv + x

    # avg_pool2d over 1x1 spatial + squeeze == identity on (TB, H); then fc1.
    h = jnp.maximum(x, 0.0).astype(wfc_ref.dtype)
    o_ref[...] = jnp.dot(h, wfc_ref[...],
                         preferred_element_type=jnp.float32) + bfc_ref[...]


def init_params(key):
    """Deterministic parameters with PyTorch-default uniform fan-in bounds."""
    k1, k2, k3, k5, k6 = jax.random.split(key, 5)

    # conv1_sub.conv: Conv2d(3, HIDDEN, 32)
    bound1 = 1.0 / float(K) ** 0.5
    w1 = jax.random.uniform(k1, (HIDDEN, IN_CH, IMG, IMG), jnp.float32,
                            -bound1, bound1)
    b1 = jax.random.uniform(k2, (HIDDEN,), jnp.float32, -bound1, bound1)

    # conv2_sub.conv: Conv2d(HIDDEN, HIDDEN, 1). Its bias is intentionally not
    # materialized: the affine=False BatchNorm that follows cancels it exactly,
    # so forward values are identical with or without it.
    bound2 = 1.0 / float(HIDDEN) ** 0.5
    w2 = jax.random.uniform(k3, (HIDDEN, HIDDEN, 1, 1), jnp.float32,
                            -bound2, bound2)

    # fc1: Linear(HIDDEN, NUM_CLASS)
    boundf = 1.0 / float(HIDDEN) ** 0.5
    wfc = jax.random.uniform(k5, (NUM_CLASS, HIDDEN), jnp.float32,
                             -boundf, boundf)
    bfc = jax.random.uniform(k6, (NUM_CLASS,), jnp.float32, -boundf, boundf)

    # Re-layout for the kernel (matmul form: x @ W^T == x @ W_t).
    # w1 stays (K, H) in HBM — do NOT pad its lanes to 128 (4x HBM traffic on
    # the dominant transfer for negligible VMEM gain).
    w1_t = w1.reshape(HIDDEN, K).T                      # (K, H), (C,KH,KW) row-major
    b1_r = b1.reshape(1, HIDDEN)
    w2_t = w2.reshape(HIDDEN, HIDDEN).T                 # (H_in, H_out)
    # fc1 weights/bias zero-padded to a lane-dense 128-wide output; the wrapper
    # slices the first NUM_CLASS columns back out.
    wfc_t = jnp.zeros((HIDDEN, OUT_PAD), jnp.float32).at[:, :NUM_CLASS].set(wfc.T)
    bfc_r = jnp.zeros((1, OUT_PAD), jnp.float32).at[:, :NUM_CLASS].set(bfc)
    return (w1_t, b1_r, w2_t, wfc_t, bfc_r)


@functools.partial(jax.jit, static_argnames=("use_bf16",))
def net3fcbrc_forward(x_nchw, params, use_bf16=False):
    B = x_nchw.shape[0]
    assert x_nchw.shape[1:] == (IN_CH, IMG, IMG), (
        "kernel assumes 32x32 input so conv1 (kernel=32) yields 1x1 spatial")
    # TODO(synk): general spatial sizes (>32) would need an im2col gather +
    # per-position pooling; the 32x32 case (what the architecture targets) is
    # handled exactly.
    x_flat = x_nchw.reshape(B, K)
    w1_t, b1_r, w2_t, wfc_t, bfc_r = params

    if use_bf16:
        # Halve the dominant w1 HBM->VMEM bytes; MXU accumulates in f32 and all
        # VPU/EUP (relu, BN, rsqrt, residual) math stays f32. Numerics differ
        # slightly from the f32 PyTorch reference — keep use_bf16=False for parity.
        x_flat = x_flat.astype(jnp.bfloat16)
        w1_t = w1_t.astype(jnp.bfloat16)
        w2_t = w2_t.astype(jnp.bfloat16)
        wfc_t = wfc_t.astype(jnp.bfloat16)

    # Full-batch BatchNorm statistics require the whole batch inside one tile,
    # so TILE_B == B (grid size 1). The gridded structure (weights resident via
    # constant index_maps, batch axis "parallel") is ready for larger batches
    # once BN is handled with a two-pass / accumulate-finalize scheme.
    tile_b = B
    grid = (pl.cdiv(B, tile_b),)

    inputs = (x_flat, w1_t, b1_r, w2_t, wfc_t, bfc_r)
    flops = (2 * tile_b * K * HIDDEN
             + N_RES_STEPS * 2 * tile_b * HIDDEN * HIDDEN
             + 2 * tile_b * HIDDEN * OUT_PAD)
    bytes_accessed = (sum(a.size * a.dtype.itemsize for a in inputs)
                      + B * OUT_PAD * 4)
    cost = pl.CostEstimate(flops=flops,
                           transcendentals=N_RES_STEPS * HIDDEN,
                           bytes_accessed=bytes_accessed)

    out_padded = pl.pallas_call(
        net3fcbrc_kernel,
        out_shape=jax.ShapeDtypeStruct((B, OUT_PAD), jnp.float32),
        grid=grid,
        in_specs=[
            pl.BlockSpec((tile_b, K), lambda i: (i, 0)),        # x: batch-tiled
            pl.BlockSpec((K, HIDDEN), lambda i: (0, 0)),        # w1: resident
            pl.BlockSpec((1, HIDDEN), lambda i: (0, 0)),        # b1: resident
            pl.BlockSpec((HIDDEN, HIDDEN), lambda i: (0, 0)),   # w2: resident
            pl.BlockSpec((HIDDEN, OUT_PAD), lambda i: (0, 0)),  # wfc: resident
            pl.BlockSpec((1, OUT_PAD), lambda i: (0, 0)),       # bfc: resident
        ],
        out_specs=pl.BlockSpec((tile_b, OUT_PAD), lambda i: (i, 0)),
        compiler_params=pltpu.CompilerParams(
            dimension_semantics=("parallel",)),
        cost_estimate=cost,
    )(*inputs)

    return out_padded[:, :NUM_CLASS]


if __name__ == "__main__":
    key = jax.random.PRNGKey(0)
    kx, kp = jax.random.split(key)
    x = jax.random.normal(kx, (BATCH, IN_CH, IMG, IMG), jnp.float32)
    params = init_params(kp)

    # Exact-parity f32 path.
    out = net3fcbrc_forward(x, params, use_bf16=False)
    jax.block_until_ready(out)
    assert out.shape == (BATCH, NUM_CLASS) and out.dtype == jnp.float32

    # bf16 matmul-operand path (DMA-byte win on v6e/v7x); f32 accumulation.
    out_bf16 = net3fcbrc_forward(x, params, use_bf16=True)
    jax.block_until_ready(out_bf16)
    assert out_bf16.shape == (BATCH, NUM_CLASS)

    print("KERNEL_OK")
</pallas_src>

<mosaic_0001>
module attributes {stable_mosaic.version = 11 : i64} {
  func.func @net3fcbrc_kernel(%arg0: i32, %arg1: memref<2x3072xf32, #tpu.memory_space<vmem>>, %arg2: memref<3072x32xf32, #tpu.memory_space<vmem>>, %arg3: memref<1x32xf32, #tpu.memory_space<vmem>>, %arg4: memref<32x32xf32, #tpu.memory_space<vmem>>, %arg5: memref<32x128xf32, #tpu.memory_space<vmem>>, %arg6: memref<1x128xf32, #tpu.memory_space<vmem>>, %arg7: memref<2x128xf32, #tpu.memory_space<vmem>>) attributes {dimension_semantics = [#tpu.dimension_semantics<parallel>], iteration_bounds = array<i64: 1>, scalar_prefetch = 0 : i64, scratch_operands = 0 : i64, tpu.core_type = #tpu.core_type<tc>, window_params = [{transform_indices = @transform_0, window_bounds = array<i64: 2, 3072>}, {pipeline_mode = #tpu.pipeline_mode<synchronous>, transform_indices = @transform_1, window_bounds = array<i64: 3072, 32>}, {pipeline_mode = #tpu.pipeline_mode<synchronous>, transform_indices = @transform_2, window_bounds = array<i64: 1, 32>}, {pipeline_mode = #tpu.pipeline_mode<synchronous>, transform_indices = @transform_3, window_bounds = array<i64: 32, 32>}, {pipeline_mode = #tpu.pipeline_mode<synchronous>, transform_indices = @transform_4, window_bounds = array<i64: 32, 128>}, {pipeline_mode = #tpu.pipeline_mode<synchronous>, transform_indices = @transform_5, window_bounds = array<i64: 1, 128>}, {transform_indices = @transform_6, window_bounds = array<i64: 2, 128>}]} {
    %c0 = arith.constant 0 : index
    %c0_0 = arith.constant 0 : index
    %0 = vector.load %arg1[%c0, %c0_0] : memref<2x3072xf32, #tpu.memory_space<vmem>>, vector<2x3072xf32>
    %c0_1 = arith.constant 0 : index
    %c0_2 = arith.constant 0 : index
    %1 = vector.load %arg2[%c0_1, %c0_2] : memref<3072x32xf32, #tpu.memory_space<vmem>>, vector<3072x32xf32>
    %cst = arith.constant dense<0.000000e+00> : vector<2x32xf32>
    %2 = tpu.matmul %0, %1, %cst {dimension_numbers = #tpu.dot_dimension_numbers<[1], [0], [0], [1], [0, 0, 1, 1], [], []>} : vector<2x3072xf32>, vector<3072x32xf32>, vector<2x32xf32> -> vector<2x32xf32>
    %c0_3 = arith.constant 0 : index
    %c0_4 = arith.constant 0 : index
    %3 = vector.load %arg3[%c0_3, %c0_4] : memref<1x32xf32, #tpu.memory_space<vmem>>, vector<1x32xf32>
    %4 = vector.broadcast %3 : vector<1x32xf32> to vector<2x32xf32>
    %5 = arith.addf %2, %4 : vector<2x32xf32>
    %cst_5 = arith.constant 0.000000e+00 : f32
    %6 = vector.broadcast %cst_5 : f32 to vector<2x32xf32>
    %7 = arith.maximumf %5, %6 : vector<2x32xf32>
    %c0_6 = arith.constant 0 : index
    %c0_7 = arith.constant 0 : index
    %8 = vector.load %arg4[%c0_6, %c0_7] : memref<32x32xf32, #tpu.memory_space<vmem>>, vector<32x32xf32>
    %cst_8 = arith.constant dense<0.000000e+00> : vector<2x32xf32>
    %9 = tpu.matmul %7, %8, %cst_8 {dimension_numbers = #tpu.dot_dimension_numbers<[1], [0], [0], [1], [0, 0, 1, 1], [], []>} : vector<2x32xf32>, vector<32x32xf32>, vector<2x32xf32> -> vector<2x32xf32>
    %cst_9 = arith.constant dense<0.000000e+00> : vector<32xf32>
    %10 = vector.multi_reduction <add>, %9, %cst_9 [0] : vector<2x32xf32> to vector<32xf32>
    %11 = vector.shape_cast %10 : vector<32xf32> to vector<1x32xf32>
    %cst_10 = arith.constant 2.000000e+00 : f32
    %12 = vector.broadcast %cst_10 : f32 to vector<1x32xf32>
    %13 = arith.divf %11, %12 : vector<1x32xf32>
    %14 = vector.broadcast %13 : vector<1x32xf32> to vector<2x32xf32>
    %15 = arith.subf %9, %14 : vector<2x32xf32>
    %16 = arith.mulf %15, %15 : vector<2x32xf32>
    %cst_11 = arith.constant dense<0.000000e+00> : vector<32xf32>
    %17 = vector.multi_reduction <add>, %16, %cst_11 [0] : vector<2x32xf32> to vector<32xf32>
    %18 = vector.shape_cast %17 : vector<32xf32> to vector<1x32xf32>
    %cst_12 = arith.constant 2.000000e+00 : f32
    %19 = vector.broadcast %cst_12 : f32 to vector<1x32xf32>
    %20 = arith.divf %18, %19 : vector<1x32xf32>
    %cst_13 = arith.constant 9.99999974E-6 : f32
    %21 = vector.broadcast %cst_13 : f32 to vector<1x32xf32>
    %22 = arith.addf %20, %21 : vector<1x32xf32>
    %23 = math.rsqrt %22 : vector<1x32xf32>
    %cst_14 = arith.constant 1.000000e-01 : f32
    %24 = vector.broadcast %cst_14 : f32 to vector<1x32xf32>
    %25 = arith.mulf %23, %24 : vector<1x32xf32>
    %26 = vector.broadcast %25 : vector<1x32xf32> to vector<2x32xf32>
    %27 = arith.mulf %15, %26 : vector<2x32xf32>
    %28 = arith.addf %27, %5 : vector<2x32xf32>
    %cst_15 = arith.constant 0.000000e+00 : f32
    %29 = vector.broadcast %cst_15 : f32 to vector<2x32xf32>
    %30 = arith.maximumf %28, %29 : vector<2x32xf32>
    %c0_16 = arith.constant 0 : index
    %c0_17 = arith.constant 0 : index
    %31 = vector.load %arg4[%c0_16, %c0_17] : memref<32x32xf32, #tpu.memory_space<vmem>>, vector<32x32xf32>
    %cst_18 = arith.constant dense<0.000000e+00> : vector<2x32xf32>
    %32 = tpu.matmul %30, %31, %cst_18 {dimension_numbers = #tpu.dot_dimension_numbers<[1], [0], [0], [1], [0, 0, 1, 1], [], []>} : vector<2x32xf32>, vector<32x32xf32>, vector<2x32xf32> -> vector<2x32xf32>
    %cst_19 = arith.constant dense<0.000000e+00> : vector<32xf32>
    %33 = vector.multi_reduction <add>, %32, %cst_19 [0] : vector<2x32xf32> to vector<32xf32>
    %34 = vector.shape_cast %33 : vector<32xf32> to vector<1x32xf32>
    %cst_20 = arith.constant 2.000000e+00 : f32
    %35 = vector.broadcast %cst_20 : f32 to vector<1x32xf32>
    %36 = arith.divf %34, %35 : vector<1x32xf32>
    %37 = vector.broadcast %36 : vector<1x32xf32> to vector<2x32xf32>
    %38 = arith.subf %32, %37 : vector<2x32xf32>
    %39 = arith.mulf %38, %38 : vector<2x32xf32>
    %cst_21 = arith.constant dense<0.000000e+00> : vector<32xf32>
    %40 = vector.multi_reduction <add>, %39, %cst_21 [0] : vector<2x32xf32> to vector<32xf32>
    %41 = vector.shape_cast %40 : vector<32xf32> to vector<1x32xf32>
    %cst_22 = arith.constant 2.000000e+00 : f32
    %42 = vector.broadcast %cst_22 : f32 to vector<1x32xf32>
    %43 = arith.divf %41, %42 : vector<1x32xf32>
    %cst_23 = arith.constant 9.99999974E-6 : f32
    %44 = vector.broadcast %cst_23 : f32 to vector<1x32xf32>
    %45 = arith.addf %43, %44 : vector<1x32xf32>
    %46 = math.rsqrt %45 : vector<1x32xf32>
    %cst_24 = arith.constant 1.000000e-01 : f32
    %47 = vector.broadcast %cst_24 : f32 to vector<1x32xf32>
    %48 = arith.mulf %46, %47 : vector<1x32xf32>
    %49 = vector.broadcast %48 : vector<1x32xf32> to vector<2x32xf32>
    %50 = arith.mulf %38, %49 : vector<2x32xf32>
    %51 = arith.addf %50, %28 : vector<2x32xf32>
    %cst_25 = arith.constant 0.000000e+00 : f32
    %52 = vector.broadcast %cst_25 : f32 to vector<2x32xf32>
    %53 = arith.maximumf %51, %52 : vector<2x32xf32>
    %c0_26 = arith.constant 0 : index
    %c0_27 = arith.constant 0 : index
    %54 = vector.load %arg4[%c0_26, %c0_27] : memref<32x32xf32, #tpu.memory_space<vmem>>, vector<32x32xf32>
    %cst_28 = arith.constant dense<0.000000e+00> : vector<2x32xf32>
    %55 = tpu.matmul %53, %54, %cst_28 {dimension_numbers = #tpu.dot_dimension_numbers<[1], [0], [0], [1], [0, 0, 1, 1], [], []>} : vector<2x32xf32>, vector<32x32xf32>, vector<2x32xf32> -> vector<2x32xf32>
    %cst_29 = arith.constant dense<0.000000e+00> : vector<32xf32>
    %56 = vector.multi_reduction <add>, %55, %cst_29 [0] : vector<2x32xf32> to vector<32xf32>
    %57 = vector.shape_cast %56 : vector<32xf32> to vector<1x32xf32>
    %cst_30 = arith.constant 2.000000e+00 : f32
    %58 = vector.broadcast %cst_30 : f32 to vector<1x32xf32>
    %59 = arith.divf %57, %58 : vector<1x32xf32>
    %60 = vector.broadcast %59 : vector<1x32xf32> to vector<2x32xf32>
    %61 = arith.subf %55, %60 : vector<2x32xf32>
    %62 = arith.mulf %61, %61 : vector<2x32xf32>
    %cst_31 = arith.constant dense<0.000000e+00> : vector<32xf32>
    %63 = vector.multi_reduction <add>, %62, %cst_31 [0] : vector<2x32xf32> to vector<32xf32>
    %64 = vector.shape_cast %63 : vector<32xf32> to vector<1x32xf32>
    %cst_32 = arith.constant 2.000000e+00 : f32
    %65 = vector.broadcast %cst_32 : f32 to vector<1x32xf32>
    %66 = arith.divf %64, %65 : vector<1x32xf32>
    %cst_33 = arith.constant 9.99999974E-6 : f32
    %67 = vector.broadcast %cst_33 : f32 to vector<1x32xf32>
    %68 = arith.addf %66, %67 : vector<1x32xf32>
    %69 = math.rsqrt %68 : vector<1x32xf32>
    %cst_34 = arith.constant 1.000000e-01 : f32
    %70 = vector.broadcast %cst_34 : f32 to vector<1x32xf32>
    %71 = arith.mulf %69, %70 : vector<1x32xf32>
    %72 = vector.broadcast %71 : vector<1x32xf32> to vector<2x32xf32>
    %73 = arith.mulf %61, %72 : vector<2x32xf32>
    %74 = arith.addf %73, %51 : vector<2x32xf32>
    %cst_35 = arith.constant 0.000000e+00 : f32
    %75 = vector.broadcast %cst_35 : f32 to vector<2x32xf32>
    %76 = arith.maximumf %74, %75 : vector<2x32xf32>
    %c0_36 = arith.constant 0 : index
    %c0_37 = arith.constant 0 : index
    %77 = vector.load %arg4[%c0_36, %c0_37] : memref<32x32xf32, #tpu.memory_space<vmem>>, vector<32x32xf32>
    %cst_38 = arith.constant dense<0.000000e+00> : vector<2x32xf32>
    %78 = tpu.matmul %76, %77, %cst_38 {dimension_numbers = #tpu.dot_dimension_numbers<[1], [0], [0], [1], [0, 0, 1, 1], [], []>} : vector<2x32xf32>, vector<32x32xf32>, vector<2x32xf32> -> vector<2x32xf32>
    %cst_39 = arith.constant dense<0.000000e+00> : vector<32xf32>
    %79 = vector.multi_reduction <add>, %78, %cst_39 [0] : vector<2x32xf32> to vector<32xf32>
    %80 = vector.shape_cast %79 : vector<32xf32> to vector<1x32xf32>
    %cst_40 = arith.constant 2.000000e+00 : f32
    %81 = vector.broadcast %cst_40 : f32 to vector<1x32xf32>
    %82 = arith.divf %80, %81 : vector<1x32xf32>
    %83 = vector.broadcast %82 : vector<1x32xf32> to vector<2x32xf32>
    %84 = arith.subf %78, %83 : vector<2x32xf32>
    %85 = arith.mulf %84, %84 : vector<2x32xf32>
    %cst_41 = arith.constant dense<0.000000e+00> : vector<32xf32>
    %86 = vector.multi_reduction <add>, %85, %cst_41 [0] : vector<2x32xf32> to vector<32xf32>
    %87 = vector.shape_cast %86 : vector<32xf32> to vector<1x32xf32>
    %cst_42 = arith.constant 2.000000e+00 : f32
    %88 = vector.broadcast %cst_42 : f32 to vector<1x32xf32>
    %89 = arith.divf %87, %88 : vector<1x32xf32>
    %cst_43 = arith.constant 9.99999974E-6 : f32
    %90 = vector.broadcast %cst_43 : f32 to vector<1x32xf32>
    %91 = arith.addf %89, %90 : vector<1x32xf32>
    %92 = math.rsqrt %91 : vector<1x32xf32>
    %cst_44 = arith.constant 1.000000e-01 : f32
    %93 = vector.broadcast %cst_44 : f32 to vector<1x32xf32>
    %94 = arith.mulf %92, %93 : vector<1x32xf32>
    %95 = vector.broadcast %94 : vector<1x32xf32> to vector<2x32xf32>
    %96 = arith.mulf %84, %95 : vector<2x32xf32>
    %97 = arith.addf %96, %74 : vector<2x32xf32>
    %cst_45 = arith.constant 0.000000e+00 : f32
    %98 = vector.broadcast %cst_45 : f32 to vector<2x32xf32>
    %99 = arith.maximumf %97, %98 : vector<2x32xf32>
    %c0_46 = arith.constant 0 : index
    %c0_47 = arith.constant 0 : index
    %100 = vector.load %arg4[%c0_46, %c0_47] : memref<32x32xf32, #tpu.memory_space<vmem>>, vector<32x32xf32>
    %cst_48 = arith.constant dense<0.000000e+00> : vector<2x32xf32>
    %101 = tpu.matmul %99, %100, %cst_48 {dimension_numbers = #tpu.dot_dimension_numbers<[1], [0], [0], [1], [0, 0, 1, 1], [], []>} : vector<2x32xf32>, vector<32x32xf32>, vector<2x32xf32> -> vector<2x32xf32>
    %cst_49 = arith.constant dense<0.000000e+00> : vector<32xf32>
    %102 = vector.multi_reduction <add>, %101, %cst_49 [0] : vector<2x32xf32> to vector<32xf32>
    %103 = vector.shape_cast %102 : vector<32xf32> to vector<1x32xf32>
    %cst_50 = arith.constant 2.000000e+00 : f32
    %104 = vector.broadcast %cst_50 : f32 to vector<1x32xf32>
    %105 = arith.divf %103, %104 : vector<1x32xf32>
    %106 = vector.broadcast %105 : vector<1x32xf32> to vector<2x32xf32>
    %107 = arith.subf %101, %106 : vector<2x32xf32>
    %108 = arith.mulf %107, %107 : vector<2x32xf32>
    %cst_51 = arith.constant dense<0.000000e+00> : vector<32xf32>
    %109 = vector.multi_reduction <add>, %108, %cst_51 [0] : vector<2x32xf32> to vector<32xf32>
    %110 = vector.shape_cast %109 : vector<32xf32> to vector<1x32xf32>
    %cst_52 = arith.constant 2.000000e+00 : f32
    %111 = vector.broadcast %cst_52 : f32 to vector<1x32xf32>
    %112 = arith.divf %110, %111 : vector<1x32xf32>
    %cst_53 = arith.constant 9.99999974E-6 : f32
    %113 = vector.broadcast %cst_53 : f32 to vector<1x32xf32>
    %114 = arith.addf %112, %113 : vector<1x32xf32>
    %115 = math.rsqrt %114 : vector<1x32xf32>
    %cst_54 = arith.constant 1.000000e-01 : f32
    %116 = vector.broadcast %cst_54 : f32 to vector<1x32xf32>
    %117 = arith.mulf %115, %116 : vector<1x32xf32>
    %118 = vector.broadcast %117 : vector<1x32xf32> to vector<2x32xf32>
    %119 = arith.mulf %107, %118 : vector<2x32xf32>
    %120 = arith.addf %119, %97 : vector<2x32xf32>
    %cst_55 = arith.constant 0.000000e+00 : f32
    %121 = vector.broadcast %cst_55 : f32 to vector<2x32xf32>
    %122 = arith.maximumf %120, %121 : vector<2x32xf32>
    %c0_56 = arith.constant 0 : index
    %c0_57 = arith.constant 0 : index
    %123 = vector.load %arg5[%c0_56, %c0_57] : memref<32x128xf32, #tpu.memory_space<vmem>>, vector<32x128xf32>
    %cst_58 = arith.constant dense<0.000000e+00> : vector<2x128xf32>
    %124 = tpu.matmul %122, %123, %cst_58 {dimension_numbers = #tpu.dot_dimension_numbers<[1], [0], [0], [1], [0, 0, 1, 1], [], []>} : vector<2x32xf32>, vector<32x128xf32>, vector<2x128xf32> -> vector<2x128xf32>
    %c0_59 = arith.constant 0 : index
    %c0_60 = arith.constant 0 : index
    %125 = vector.load %arg6[%c0_59, %c0_60] : memref<1x128xf32, #tpu.memory_space<vmem>>, vector<1x128xf32>
    %126 = vector.broadcast %125 : vector<1x128xf32> to vector<2x128xf32>
    %127 = arith.addf %124, %126 : vector<2x128xf32>
    %c0_61 = arith.constant 0 : index
    %c0_62 = arith.constant 0 : index
    %128 = vector.load %arg7[%c0_61, %c0_62] : memref<2x128xf32, #tpu.memory_space<vmem>>, vector<2x128xf32>
    tpu.vector_store %arg7[%c0_61, %c0_62], %127 {strides = array<i32>} : memref<2x128xf32, #tpu.memory_space<vmem>>, vector<2x128xf32>,
    return
  }
  func.func @transform_0(%arg0: i32) -> (i32, i32) {
    %c0_i32 = arith.constant 0 : i32
    %c0_i32_0 = arith.constant 0 : i32
    return %arg0, %c0_i32 : i32, i32
  }
  func.func @transform_1(%arg0: i32) -> (i32, i32) {
    %c0_i32 = arith.constant 0 : i32
    %c0_i32_0 = arith.constant 0 : i32
    %c0_i32_1 = arith.constant 0 : i32
    return %c0_i32, %c0_i32_0 : i32, i32
  }
  func.func @transform_2(%arg0: i32) -> (i32, i32) {
    %c0_i32 = arith.constant 0 : i32
    %c0_i32_0 = arith.constant 0 : i32
    %c0_i32_1 = arith.constant 0 : i32
    return %c0_i32, %c0_i32_0 : i32, i32
  }
  func.func @transform_3(%arg0: i32) -> (i32, i32) {
    %c0_i32 = arith.constant 0 : i32
    %c0_i32_0 = arith.constant 0 : i32
    %c0_i32_1 = arith.constant 0 : i32
    return %c0_i32, %c0_i32_0 : i32, i32
  }
  func.func @transform_4(%arg0: i32) -> (i32, i32) {
    %c0_i32 = arith.constant 0 : i32
    %c0_i32_0 = arith.constant 0 : i32
    %c0_i32_1 = arith.constant 0 : i32
    return %c0_i32, %c0_i32_0 : i32, i32
  }
  func.func @transform_5(%arg0: i32) -> (i32, i32) {
    %c0_i32 = arith.constant 0 : i32
    %c0_i32_0 = arith.constant 0 : i32
    %c0_i32_1 = arith.constant 0 : i32
    return %c0_i32, %c0_i32_0 : i32, i32
  }
  func.func @transform_6(%arg0: i32) -> (i32, i32) {
    %c0_i32 = arith.constant 0 : i32
    %c0_i32_0 = arith.constant 0 : i32
    return %arg0, %c0_i32 : i32, i32
  }
}

</mosaic_0001>

<llo_original>
// kernel: net3fcbrc_forward.1
$region0: #{net3fcbrc_forward.1}
  #allocation0 [shape = 'u32[]', space=smem, size = 0x4, offset = 0x4, fixed_abs, tag = 'smem constant byte address 0x4 - core index']
  #allocation1 [shape = 'u32[72,128]{1,0:T(1,128)}', space=vmem, size = 0x9000, scoped, tag = 'internal scratch']
  %s0 = inlined_call_operand.vmem [shape: f32[2,3072], index: 0, kind: input, shape index: {}]
  %s1 = inlined_call_operand.vmem [shape: f32[3072,32], index: 1, kind: input, shape index: {}]
  %s2 = inlined_call_operand.vmem [shape: f32[1,32], index: 2, kind: input, shape index: {}]
  %s3 = inlined_call_operand.vmem [shape: f32[32,32], index: 3, kind: input, shape index: {}]
  %s4 = inlined_call_operand.vmem [shape: f32[32,128], index: 4, kind: input, shape index: {}]
  %s5 = inlined_call_operand.vmem [shape: f32[1,128], index: 5, kind: input, shape index: {}]
  %s6 = inlined_call_operand.hbm [shape: f32[2,128], index: 6, kind: output, shape index: {}]
  %s7 = sld [smem:[#allocation0]]
  $region34: #{net3fcbrc_forward.1} parent=0
    _
  %s9 = ssub.s32 1, %s7
  %s10 = scalar_select 0, %s9, %s7
  $region1: #{net3fcbrc_forward.1} parent=0
    #allocation2 [shape = 'u8[1024]{0}', space=vmem, size = 0x400, scoped, tag = 'output window, operand 0, single buffered']
    #allocation3 [shape = 's32[1]{0}', space=sflag, size = 0x4, scoped, tag = 'scoped memory for net3fcbrc_forward.1']
    %11 = vsyncpa [#allocation3], 0
    // Predicated region
    $region2: #{net3fcbrc_forward.1} parent=1 // pred_check
      _
    $region3: #{net3fcbrc_forward.1} parent=1 // pred_check_branch
      %13 = sbr.rel (0) target = $region5
    $region4: #{net3fcbrc_forward.1} parent=1 // pred_region
      _
    $region5: #{net3fcbrc_forward.1} parent=1 // pred_fallthru
      _
    // Predicated region
    $region6: #{net3fcbrc_forward.1} parent=1 // pred_check
      _
    $region7: #{net3fcbrc_forward.1} parent=1 // pred_check_branch
      %15 = sbr.rel (0) target = $region9
    $region8: #{net3fcbrc_forward.1} parent=1 // pred_region
      _
    $region9: #{net3fcbrc_forward.1} parent=1 // pred_fallthru
      _
    // Predicated region
    $region10: #{net3fcbrc_forward.1} parent=1 // pred_check
      _
    $region11: #{net3fcbrc_forward.1} parent=1 // pred_check_branch
      %17 = sbr.rel (0) target = $region13
    $region12: #{net3fcbrc_forward.1} parent=1 // pred_region
      _
    $region13: #{net3fcbrc_forward.1} parent=1 // pred_fallthru
      _
    // Predicated region
    $region14: #{net3fcbrc_forward.1} parent=1 // pred_check
      _
    $region15: #{net3fcbrc_forward.1} parent=1 // pred_check_branch
      %19 = sbr.rel (0) target = $region17
    $region16: #{net3fcbrc_forward.1} parent=1 // pred_region
      _
    $region17: #{net3fcbrc_forward.1} parent=1 // pred_fallthru
      _
    // Predicated region
    $region18: #{net3fcbrc_forward.1} parent=1 // pred_check
      _
    $region19: #{net3fcbrc_forward.1} parent=1 // pred_check_branch
      %21 = sbr.rel (0) target = $region21
    $region20: #{net3fcbrc_forward.1} parent=1 // pred_region
      _
    $region21: #{net3fcbrc_forward.1} parent=1 // pred_fallthru
      _
    // Predicated region
    $region22: #{net3fcbrc_forward.1} parent=1 // pred_check
      _
    $region23: #{net3fcbrc_forward.1} parent=1 // pred_check_branch
      %23 = sbr.rel (0) target = $region25
    $region24: #{net3fcbrc_forward.1} parent=1 // pred_region
      _
    $region25: #{net3fcbrc_forward.1} parent=1 // pred_fallthru
      _
    %v24 = vld [vmem:[%s0] sm:$0xff]
    %v25 = vld [vmem:[%s0 + $0x8] sm:$0xff]
    %v26 = vld [vmem:[%s0 + $0x10] sm:$0xff]
    %v27 = vld [vmem:[%s0 + $0x18] sm:$0xff]
    %v28 = vld [vmem:[%s0 + $0x20] sm:$0xff]
    %v29 = vld [vmem:[%s0 + $0x28] sm:$0xff]
    %v30 = vld [vmem:[%s1] sm:$0xff]
    %v31 = vld [vmem:[%s1 + $0x8] sm:$0xff]
    %v32 = vld [vmem:[%s1 + $0x10] sm:$0xff]
    %v33 = vld [vmem:[%s1 + $0x18] sm:$0xff]
    %v34 = vld [vmem:[%s1 + $0x20] sm:$0xff]
    %v35 = vld [vmem:[%s1 + $0x28] sm:$0xff]
    %v36 = vld [vmem:[%s1 + $0x30] sm:$0xff]
    %v37 = vld [vmem:[%s1 + $0x38] sm:$0xff]
    %v38 = vld [vmem:[%s1 + $0x40] sm:$0xff]
    %v39 = vld [vmem:[%s1 + $0x48] sm:$0xff]
    %v40 = vld [vmem:[%s1 + $0x50] sm:$0xff]
    %v41 = vld [vmem:[%s1 + $0x58] sm:$0xff]
    %v42 = vld [vmem:[%s1 + $0x60] sm:$0xff]
    %v43 = vld [vmem:[%s1 + $0x68] sm:$0xff]
    %v44 = vld [vmem:[%s1 + $0x70] sm:$0xff]
    %v45 = vld [vmem:[%s1 + $0x78] sm:$0xff]
    %v46 = vld [vmem:[%s1 + $0x80] sm:$0xff]
    %v47 = vld [vmem:[%s1 + $0x88] sm:$0xff]
    %v48 = vld [vmem:[%s1 + $0x90] sm:$0xff]
    %v49 = vld [vmem:[%s1 + $0x98] sm:$0xff]
    %v50 = vld [vmem:[%s1 + $0xa0] sm:$0xff]
    %v51 = vld [vmem:[%s1 + $0xa8] sm:$0xff]
    %v52 = vld [vmem:[%s1 + $0xb0] sm:$0xff]
    %v53 = vld [vmem:[%s1 + $0xb8] sm:$0xff]
    %v54 = vld [vmem:[%s1 + $0xc0] sm:$0xff]
    %v55 = vld [vmem:[%s1 + $0xc8] sm:$0xff]
    %v56 = vld [vmem:[%s1 + $0xd0] sm:$0xff]
    %v57 = vld [vmem:[%s1 + $0xd8] sm:$0xff]
    %v58 = vld [vmem:[%s1 + $0xe0] sm:$0xff]
    %v59 = vld [vmem:[%s1 + $0xe8] sm:$0xff]
    %v60 = vld [vmem:[%s1 + $0xf0] sm:$0xff]
    %v61 = vld [vmem:[%s1 + $0xf8] sm:$0xff]
    %v62 = vld [vmem:[%s1 + $0x100] sm:$0xff]
    %v63 = vld [vmem:[%s1 + $0x108] sm:$0xff]
    %v64 = vld [vmem:[%s1 + $0x110] sm:$0xff]
    %v65 = vld [vmem:[%s1 + $0x118] sm:$0xff]
    %v66 = vld [vmem:[%s1 + $0x120] sm:$0xff]
    %v67 = vld [vmem:[%s1 + $0x128] sm:$0xff]
    %v68 = vld [vmem:[%s1 + $0x130] sm:$0xff]
    %v69 = vld [vmem:[%s1 + $0x138] sm:$0xff]
    %v70 = vld [vmem:[%s1 + $0x140] sm:$0xff]
    %v71 = vld [vmem:[%s1 + $0x148] sm:$0xff]
    %v72 = vld [vmem:[%s1 + $0x150] sm:$0xff]
    %v73 = vld [vmem:[%s1 + $0x158] sm:$0xff]
    %v74 = vld [vmem:[%s1 + $0x160] sm:$0xff]
    %v75 = vld [vmem:[%s1 + $0x168] sm:$0xff]
    %v76 = vld [vmem:[%s1 + $0x170] sm:$0xff]
    %v77 = vld [vmem:[%s1 + $0x178] sm:$0xff]
    %v78 = vld [vmem:[%s1 + $0x180] sm:$0xff]
    %v79 = vld [vmem:[%s1 + $0x188] sm:$0xff]
    %v80 = vld [vmem:[%s1 + $0x190] sm:$0xff]
    %v81 = vld [vmem:[%s1 + $0x198] sm:$0xff]
    %v82 = vld [vmem:[%s1 + $0x1a0] sm:$0xff]
    %v83 = vld [vmem:[%s1 + $0x1a8] sm:$0xff]
    %v84 = vld [vmem:[%s1 + $0x1b0] sm:$0xff]
    %v85 = vld [vmem:[%s1 + $0x1b8] sm:$0xff]
    %v86 = vld [vmem:[%s1 + $0x1c0] sm:$0xff]
    %v87 = vld [vmem:[%s1 + $0x1c8] sm:$0xff]
    %v88 = vld [vmem:[%s1 + $0x1d0] sm:$0xff]
    %v89 = vld [vmem:[%s1 + $0x1d8] sm:$0xff]
    %v90 = vld [vmem:[%s1 + $0x1e0] sm:$0xff]
    %v91 = vld [vmem:[%s1 + $0x1e8] sm:$0xff]
    %v92 = vld [vmem:[%s1 + $0x1f0] sm:$0xff]
    %v93 = vld [vmem:[%s1 + $0x1f8] sm:$0xff]
    %v94 = vld [vmem:[%s1 + $0x200] sm:$0xff]
    %v95 = vld [vmem:[%s1 + $0x208] sm:$0xff]
    %v96 = vld [vmem:[%s1 + $0x210] sm:$0xff]
    %v97 = vld [vmem:[%s1 + $0x218] sm:$0xff]
    %v98 = vld [vmem:[%s1 + $0x220] sm:$0xff]
    %v99 = vld [vmem:[%s1 + $0x228] sm:$0xff]
    %v100 = vld [vmem:[%s1 + $0x230] sm:$0xff]
    %v101 = vld [vmem:[%s1 + $0x238] sm:$0xff]
    %v102 = vld [vmem:[%s1 + $0x240] sm:$0xff]
    %v103 = vld [vmem:[%s1 + $0x248] sm:$0xff]
    %v104 = vld [vmem:[%s1 + $0x250] sm:$0xff]
    %v105 = vld [vmem:[%s1 + $0x258] sm:$0xff]
    %v106 = vld [vmem:[%s1 + $0x260] sm:$0xff]
    %v107 = vld [vmem:[%s1 + $0x268] sm:$0xff]
    %v108 = vld [vmem:[%s1 + $0x270] sm:$0xff]
    %v109 = vld [vmem:[%s1 + $0x278] sm:$0xff]
    %v110 = vld [vmem:[%s1 + $0x280] sm:$0xff]
    %v111 = vld [vmem:[%s1 + $0x288] sm:$0xff]
    %v112 = vld [vmem:[%s1 + $0x290] sm:$0xff]
    %v113 = vld [vmem:[%s1 + $0x298] sm:$0xff]
    %v114 = vld [vmem:[%s1 + $0x2a0] sm:$0xff]
    %v115 = vld [vmem:[%s1 + $0x2a8] sm:$0xff]
    %v116 = vld [vmem:[%s1 + $0x2b0] sm:$0xff]
    %v117 = vld [vmem:[%s1 + $0x2b8] sm:$0xff]
    %v118 = vld [vmem:[%s1 + $0x2c0] sm:$0xff]
    %v119 = vld [vmem:[%s1 + $0x2c8] sm:$0xff]
    %v120 = vld [vmem:[%s1 + $0x2d0] sm:$0xff]
    %v121 = vld [vmem:[%s1 + $0x2d8] sm:$0xff]
    %v122 = vld [vmem:[%s1 + $0x2e0] sm:$0xff]
    %v123 = vld [vmem:[%s1 + $0x2e8] sm:$0xff]
    %v124 = vld [vmem:[%s1 + $0x2f0] sm:$0xff]
    %v125 = vld [vmem:[%s1 + $0x2f8] sm:$0xff]
    %v126 = vld [vmem:[%s1 + $0x300] sm:$0xff]
    %v127 = vld [vmem:[%s1 + $0x308] sm:$0xff]
    %v128 = vld [vmem:[%s1 + $0x310] sm:$0xff]
    %v129 = vld [vmem:[%s1 + $0x318] sm:$0xff]
    %v130 = vld [vmem:[%s1 + $0x320] sm:$0xff]
    %v131 = vld [vmem:[%s1 + $0x328] sm:$0xff]
    %v132 = vld [vmem:[%s1 + $0x330] sm:$0xff]
    %v133 = vld [vmem:[%s1 + $0x338] sm:$0xff]
    %v134 = vld [vmem:[%s1 + $0x340] sm:$0xff]
    %v135 = vld [vmem:[%s1 + $0x348] sm:$0xff]
    %v136 = vld [vmem:[%s1 + $0x350] sm:$0xff]
    %v137 = vld [vmem:[%s1 + $0x358] sm:$0xff]
    %v138 = vld [vmem:[%s1 + $0x360] sm:$0xff]
    %v139 = vld [vmem:[%s1 + $0x368] sm:$0xff]
    %v140 = vld [vmem:[%s1 + $0x370] sm:$0xff]
    %v141 = vld [vmem:[%s1 + $0x378] sm:$0xff]
    %v142 = vld [vmem:[%s1 + $0x380] sm:$0xff]
    %v143 = vld [vmem:[%s1 + $0x388] sm:$0xff]
    %v144 = vld [vmem:[%s1 + $0x390] sm:$0xff]
    %v145 = vld [vmem:[%s1 + $0x398] sm:$0xff]
    %v146 = vld [vmem:[%s1 + $0x3a0] sm:$0xff]
    %v147 = vld [vmem:[%s1 + $0x3a8] sm:$0xff]
    %v148 = vld [vmem:[%s1 + $0x3b0] sm:$0xff]
    %v149 = vld [vmem:[%s1 + $0x3b8] sm:$0xff]
    %v150 = vld [vmem:[%s1 + $0x3c0] sm:$0xff]
    %v151 = vld [vmem:[%s1 + $0x3c8] sm:$0xff]
    %v152 = vld [vmem:[%s1 + $0x3d0] sm:$0xff]
    %v153 = vld [vmem:[%s1 + $0x3d8] sm:$0xff]
    %v154 = vld [vmem:[%s1 + $0x3e0] sm:$0xff]
    %v155 = vld [vmem:[%s1 + $0x3e8] sm:$0xff]
    %v156 = vld [vmem:[%s1 + $0x3f0] sm:$0xff]
    %v157 = vld [vmem:[%s1 + $0x3f8] sm:$0xff]
    %v158 = vld [vmem:[%s1 + $0x400] sm:$0xff]
    %v159 = vld [vmem:[%s1 + $0x408] sm:$0xff]
    %v160 = vld [vmem:[%s1 + $0x410] sm:$0xff]
    %v161 = vld [vmem:[%s1 + $0x418] sm:$0xff]
    %v162 = vld [vmem:[%s1 + $0x420] sm:$0xff]
    %v163 = vld [vmem:[%s1 + $0x428] sm:$0xff]
    %v164 = vld [vmem:[%s1 + $0x430] sm:$0xff]
    %v165 = vld [vmem:[%s1 + $0x438] sm:$0xff]
    %v166 = vld [vmem:[%s1 + $0x440] sm:$0xff]
    %v167 = vld [vmem:[%s1 + $0x448] sm:$0xff]
    %v168 = vld [vmem:[%s1 + $0x450] sm:$0xff]
    %v169 = vld [vmem:[%s1 + $0x458] sm:$0xff]
    %v170 = vld [vmem:[%s1 + $0x460] sm:$0xff]
    %v171 = vld [vmem:[%s1 + $0x468] sm:$0xff]
    %v172 = vld [vmem:[%s1 + $0x470] sm:$0xff]
    %v173 = vld [vmem:[%s1 + $0x478] sm:$0xff]
    %v174 = vld [vmem:[%s1 + $0x480] sm:$0xff]
    %v175 = vld [vmem:[%s1 + $0x488] sm:$0xff]
    %v176 = vld [vmem:[%s1 + $0x490] sm:$0xff]
    %v177 = vld [vmem:[%s1 + $0x498] sm:$0xff]
    %v178 = vld [vmem:[%s1 + $0x4a0] sm:$0xff]
    %v179 = vld [vmem:[%s1 + $0x4a8] sm:$0xff]
    %v180 = vld [vmem:[%s1 + $0x4b0] sm:$0xff]
    %v181 = vld [vmem:[%s1 + $0x4b8] sm:$0xff]
    %v182 = vld [vmem:[%s1 + $0x4c0] sm:$0xff]
    %v183 = vld [vmem:[%s1 + $0x4c8] sm:$0xff]
    %v184 = vld [vmem:[%s1 + $0x4d0] sm:$0xff]
    %v185 = vld [vmem:[%s1 + $0x4d8] sm:$0xff]
    %v186 = vld [vmem:[%s1 + $0x4e0] sm:$0xff]
    %v187 = vld [vmem:[%s1 + $0x4e8] sm:$0xff]
    %v188 = vld [vmem:[%s1 + $0x4f0] sm:$0xff]
    %v189 = vld [vmem:[%s1 + $0x4f8] sm:$0xff]
    %v190 = vld [vmem:[%s1 + $0x500] sm:$0xff]
    %v191 = vld [vmem:[%s1 + $0x508] sm:$0xff]
    %v192 = vld [vmem:[%s1 + $0x510] sm:$0xff]
    %v193 = vld [vmem:[%s1 + $0x518] sm:$0xff]
    %v194 = vld [vmem:[%s1 + $0x520] sm:$0xff]
    %v195 = vld [vmem:[%s1 + $0x528] sm:$0xff]
    %v196 = vld [vmem:[%s1 + $0x530] sm:$0xff]
    %v197 = vld [vmem:[%s1 + $0x538] sm:$0xff]
    %v198 = vld [vmem:[%s1 + $0x540] sm:$0xff]
    %v199 = vld [vmem:[%s1 + $0x548] sm:$0xff]
    %v200 = vld [vmem:[%s1 + $0x550] sm:$0xff]
    %v201 = vld [vmem:[%s1 + $0x558] sm:$0xff]
    %v202 = vld [vmem:[%s1 + $0x560] sm:$0xff]
    %v203 = vld [vmem:[%s1 + $0x568] sm:$0xff]
    %v204 = vld [vmem:[%s1 + $0x570] sm:$0xff]
    %v205 = vld [vmem:[%s1 + $0x578] sm:$0xff]
    %v206 = vld [vmem:[%s1 + $0x580] sm:$0xff]
    %v207 = vld [vmem:[%s1 + $0x588] sm:$0xff]
    %v208 = vld [vmem:[%s1 + $0x590] sm:$0xff]
    %v209 = vld [vmem:[%s1 + $0x598] sm:$0xff]
    %v210 = vld [vmem:[%s1 + $0x5a0] sm:$0xff]
    %v211 = vld [vmem:[%s1 + $0x5a8] sm:$0xff]
    %v212 = vld [vmem:[%s1 + $0x5b0] sm:$0xff]
    %v213 = vld [vmem:[%s1 + $0x5b8] sm:$0xff]
    %v214 = vld [vmem:[%s1 + $0x5c0] sm:$0xff]
    %v215 = vld [vmem:[%s1 + $0x5c8] sm:$0xff]
    %v216 = vld [vmem:[%s1 + $0x5d0] sm:$0xff]
    %v217 = vld [vmem:[%s1 + $0x5d8] sm:$0xff]
    %v218 = vld [vmem:[%s1 + $0x5e0] sm:$0xff]
    %v219 = vld [vmem:[%s1 + $0x5e8] sm:$0xff]
    %v220 = vld [vmem:[%s1 + $0x5f0] sm:$0xff]
    %v221 = vld [vmem:[%s1 + $0x5f8] sm:$0xff]
    %v222 = vld [vmem:[%s1 + $0x600] sm:$0xff]
    %v223 = vld [vmem:[%s1 + $0x608] sm:$0xff]
    %v224 = vld [vmem:[%s1 + $0x610] sm:$0xff]
    %v225 = vld [vmem:[%s1 + $0x618] sm:$0xff]
    %v226 = vld [vmem:[%s1 + $0x620] sm:$0xff]
    %v227 = vld [vmem:[%s1 + $0x628] sm:$0xff]
    %v228 = vld [vmem:[%s1 + $0x630] sm:$0xff]
    %v229 = vld [vmem:[%s1 + $0x638] sm:$0xff]
    %v230 = vld [vmem:[%s1 + $0x640] sm:$0xff]
    %v231 = vld [vmem:[%s1 + $0x648] sm:$0xff]
    %v232 = vld [vmem:[%s1 + $0x650] sm:$0xff]
    %v233 = vld [vmem:[%s1 + $0x658] sm:$0xff]
    %v234 = vld [vmem:[%s1 + $0x660] sm:$0xff]
    %v235 = vld [vmem:[%s1 + $0x668] sm:$0xff]
    %v236 = vld [vmem:[%s1 + $0x670] sm:$0xff]
    %v237 = vld [vmem:[%s1 + $0x678] sm:$0xff]
    %v238 = vld [vmem:[%s1 + $0x680] sm:$0xff]
    %v239 = vld [vmem:[%s1 + $0x688] sm:$0xff]
    %v240 = vld [vmem:[%s1 + $0x690] sm:$0xff]
    %v241 = vld [vmem:[%s1 + $0x698] sm:$0xff]
    %v242 = vld [vmem:[%s1 + $0x6a0] sm:$0xff]
    %v243 = vld [vmem:[%s1 + $0x6a8] sm:$0xff]
    %v244 = vld [vmem:[%s1 + $0x6b0] sm:$0xff]
    %v245 = vld [vmem:[%s1 + $0x6b8] sm:$0xff]
    %v246 = vld [vmem:[%s1 + $0x6c0] sm:$0xff]
    %v247 = vld [vmem:[%s1 + $0x6c8] sm:$0xff]
    %v248 = vld [vmem:[%s1 + $0x6d0] sm:$0xff]
    %v249 = vld [vmem:[%s1 + $0x6d8] sm:$0xff]
    %v250 = vld [vmem:[%s1 + $0x6e0] sm:$0xff]
    %v251 = vld [vmem:[%s1 + $0x6e8] sm:$0xff]
    %v252 = vld [vmem:[%s1 + $0x6f0] sm:$0xff]
    %v253 = vld [vmem:[%s1 + $0x6f8] sm:$0xff]
    %v254 = vld [vmem:[%s1 + $0x700] sm:$0xff]
    %v255 = vld [vmem:[%s1 + $0x708] sm:$0xff]
    %v256 = vld [vmem:[%s1 + $0x710] sm:$0xff]
    %v257 = vld [vmem:[%s1 + $0x718] sm:$0xff]
    %v258 = vld [vmem:[%s1 + $0x720] sm:$0xff]
    %v259 = vld [vmem:[%s1 + $0x728] sm:$0xff]
    %v260 = vld [vmem:[%s1 + $0x730] sm:$0xff]
    %v261 = vld [vmem:[%s1 + $0x738] sm:$0xff]
    %v262 = vld [vmem:[%s1 + $0x740] sm:$0xff]
    %v263 = vld [vmem:[%s1 + $0x748] sm:$0xff]
    %v264 = vld [vmem:[%s1 + $0x750] sm:$0xff]
    %v265 = vld [vmem:[%s1 + $0x758] sm:$0xff]
    %v266 = vld [vmem:[%s1 + $0x760] sm:$0xff]
    %v267 = vld [vmem:[%s1 + $0x768] sm:$0xff]
    %v268 = vld [vmem:[%s1 + $0x770] sm:$0xff]
    %v269 = vld [vmem:[%s1 + $0x778] sm:$0xff]
    %v270 = vld [vmem:[%s1 + $0x780] sm:$0xff]
    %v271 = vld [vmem:[%s1 + $0x788] sm:$0xff]
    %v272 = vld [vmem:[%s1 + $0x790] sm:$0xff]
    %v273 = vld [vmem:[%s1 + $0x798] sm:$0xff]
    %v274 = vld [vmem:[%s1 + $0x7a0] sm:$0xff]
    %v275 = vld [vmem:[%s1 + $0x7a8] sm:$0xff]
    %v276 = vld [vmem:[%s1 + $0x7b0] sm:$0xff]
    %v277 = vld [vmem:[%s1 + $0x7b8] sm:$0xff]
    %v278 = vld [vmem:[%s1 + $0x7c0] sm:$0xff]
    %v279 = vld [vmem:[%s1 + $0x7c8] sm:$0xff]
    %v280 = vld [vmem:[%s1 + $0x7d0] sm:$0xff]
    %v281 = vld [vmem:[%s1 + $0x7d8] sm:$0xff]
    %v282 = vld [vmem:[%s1 + $0x7e0] sm:$0xff]
    %v283 = vld [vmem:[%s1 + $0x7e8] sm:$0xff]
    %v284 = vld [vmem:[%s1 + $0x7f0] sm:$0xff]
    %v285 = vld [vmem:[%s1 + $0x7f8] sm:$0xff]
    %v286 = vld [vmem:[%s1 + $0x800] sm:$0xff]
    %v287 = vld [vmem:[%s1 + $0x808] sm:$0xff]
    %v288 = vld [vmem:[%s1 + $0x810] sm:$0xff]
    %v289 = vld [vmem:[%s1 + $0x818] sm:$0xff]
    %v290 = vld [vmem:[%s1 + $0x820] sm:$0xff]
    %v291 = vld [vmem:[%s1 + $0x828] sm:$0xff]
    %v292 = vld [vmem:[%s1 + $0x830] sm:$0xff]
    %v293 = vld [vmem:[%s1 + $0x838] sm:$0xff]
    %v294 = vld [vmem:[%s1 + $0x840] sm:$0xff]
    %v295 = vld [vmem:[%s1 + $0x848] sm:$0xff]
    %v296 = vld [vmem:[%s1 + $0x850] sm:$0xff]
    %v297 = vld [vmem:[%s1 + $0x858] sm:$0xff]
    %v298 = vld [vmem:[%s1 + $0x860] sm:$0xff]
    %v299 = vld [vmem:[%s1 + $0x868] sm:$0xff]
    %v300 = vld [vmem:[%s1 + $0x870] sm:$0xff]
    %v301 = vld [vmem:[%s1 + $0x878] sm:$0xff]
    %v302 = vld [vmem:[%s1 + $0x880] sm:$0xff]
    %v303 = vld [vmem:[%s1 + $0x888] sm:$0xff]
    %v304 = vld [vmem:[%s1 + $0x890] sm:$0xff]
    %v305 = vld [vmem:[%s1 + $0x898] sm:$0xff]
    %v306 = vld [vmem:[%s1 + $0x8a0] sm:$0xff]
    %v307 = vld [vmem:[%s1 + $0x8a8] sm:$0xff]
    %v308 = vld [vmem:[%s1 + $0x8b0] sm:$0xff]
    %v309 = vld [vmem:[%s1 + $0x8b8] sm:$0xff]
    %v310 = vld [vmem:[%s1 + $0x8c0] sm:$0xff]
    %v311 = vld [vmem:[%s1 + $0x8c8] sm:$0xff]
    %v312 = vld [vmem:[%s1 + $0x8d0] sm:$0xff]
    %v313 = vld [vmem:[%s1 + $0x8d8] sm:$0xff]
    %v314 = vld [vmem:[%s1 + $0x8e0] sm:$0xff]
    %v315 = vld [vmem:[%s1 + $0x8e8] sm:$0xff]
    %v316 = vld [vmem:[%s1 + $0x8f0] sm:$0xff]
    %v317 = vld [vmem:[%s1 + $0x8f8] sm:$0xff]
    %v318 = vld [vmem:[%s1 + $0x900] sm:$0xff]
    %v319 = vld [vmem:[%s1 + $0x908] sm:$0xff]
    %v320 = vld [vmem:[%s1 + $0x910] sm:$0xff]
    %v321 = vld [vmem:[%s1 + $0x918] sm:$0xff]
    %v322 = vld [vmem:[%s1 + $0x920] sm:$0xff]
    %v323 = vld [vmem:[%s1 + $0x928] sm:$0xff]
    %v324 = vld [vmem:[%s1 + $0x930] sm:$0xff]
    %v325 = vld [vmem:[%s1 + $0x938] sm:$0xff]
    %v326 = vld [vmem:[%s1 + $0x940] sm:$0xff]
    %v327 = vld [vmem:[%s1 + $0x948] sm:$0xff]
    %v328 = vld [vmem:[%s1 + $0x950] sm:$0xff]
    %v329 = vld [vmem:[%s1 + $0x958] sm:$0xff]
    %v330 = vld [vmem:[%s1 + $0x960] sm:$0xff]
    %v331 = vld [vmem:[%s1 + $0x968] sm:$0xff]
    %v332 = vld [vmem:[%s1 + $0x970] sm:$0xff]
    %v333 = vld [vmem:[%s1 + $0x978] sm:$0xff]
    %v334 = vld [vmem:[%s1 + $0x980] sm:$0xff]
    %v335 = vld [vmem:[%s1 + $0x988] sm:$0xff]
    %v336 = vld [vmem:[%s1 + $0x990] sm:$0xff]
    %v337 = vld [vmem:[%s1 + $0x998] sm:$0xff]
    %v338 = vld [vmem:[%s1 + $0x9a0] sm:$0xff]
    %v339 = vld [vmem:[%s1 + $0x9a8] sm:$0xff]
    %v340 = vld [vmem:[%s1 + $0x9b0] sm:$0xff]
    %v341 = vld [vmem:[%s1 + $0x9b8] sm:$0xff]
    %v342 = vld [vmem:[%s1 + $0x9c0] sm:$0xff]
    %v343 = vld [vmem:[%s1 + $0x9c8] sm:$0xff]
    %v344 = vld [vmem:[%s1 + $0x9d0] sm:$0xff]
    %v345 = vld [vmem:[%s1 + $0x9d8] sm:$0xff]
    %v346 = vld [vmem:[%s1 + $0x9e0] sm:$0xff]
    %v347 = vld [vmem:[%s1 + $0x9e8] sm:$0xff]
    %v348 = vld [vmem:[%s1 + $0x9f0] sm:$0xff]
    %v349 = vld [vmem:[%s1 + $0x9f8] sm:$0xff]
    %v350 = vld [vmem:[%s1 + $0xa00] sm:$0xff]
    %v351 = vld [vmem:[%s1 + $0xa08] sm:$0xff]
    %v352 = vld [vmem:[%s1 + $0xa10] sm:$0xff]
    %v353 = vld [vmem:[%s1 + $0xa18] sm:$0xff]
    %v354 = vld [vmem:[%s1 + $0xa20] sm:$0xff]
    %v355 = vld [vmem:[%s1 + $0xa28] sm:$0xff]
    %v356 = vld [vmem:[%s1 + $0xa30] sm:$0xff]
    %v357 = vld [vmem:[%s1 + $0xa38] sm:$0xff]
    %v358 = vld [vmem:[%s1 + $0xa40] sm:$0xff]
    %v359 = vld [vmem:[%s1 + $0xa48] sm:$0xff]
    %v360 = vld [vmem:[%s1 + $0xa50] sm:$0xff]
    %v361 = vld [vmem:[%s1 + $0xa58] sm:$0xff]
    %v362 = vld [vmem:[%s1 + $0xa60] sm:$0xff]
    %v363 = vld [vmem:[%s1 + $0xa68] sm:$0xff]
    %v364 = vld [vmem:[%s1 + $0xa70] sm:$0xff]
    %v365 = vld [vmem:[%s1 + $0xa78] sm:$0xff]
    %v366 = vld [vmem:[%s1 + $0xa80] sm:$0xff]
    %v367 = vld [vmem:[%s1 + $0xa88] sm:$0xff]
    %v368 = vld [vmem:[%s1 + $0xa90] sm:$0xff]
    %v369 = vld [vmem:[%s1 + $0xa98] sm:$0xff]
    %v370 = vld [vmem:[%s1 + $0xaa0] sm:$0xff]
    %v371 = vld [vmem:[%s1 + $0xaa8] sm:$0xff]
    %v372 = vld [vmem:[%s1 + $0xab0] sm:$0xff]
    %v373 = vld [vmem:[%s1 + $0xab8] sm:$0xff]
    %v374 = vld [vmem:[%s1 + $0xac0] sm:$0xff]
    %v375 = vld [vmem:[%s1 + $0xac8] sm:$0xff]
    %v376 = vld [vmem:[%s1 + $0xad0] sm:$0xff]
    %v377 = vld [vmem:[%s1 + $0xad8] sm:$0xff]
    %v378 = vld [vmem:[%s1 + $0xae0] sm:$0xff]
    %v379 = vld [vmem:[%s1 + $0xae8] sm:$0xff]
    %v380 = vld [vmem:[%s1 + $0xaf0] sm:$0xff]
    %v381 = vld [vmem:[%s1 + $0xaf8] sm:$0xff]
    %v382 = vld [vmem:[%s1 + $0xb00] sm:$0xff]
    %v383 = vld [vmem:[%s1 + $0xb08] sm:$0xff]
    %v384 = vld [vmem:[%s1 + $0xb10] sm:$0xff]
    %v385 = vld [vmem:[%s1 + $0xb18] sm:$0xff]
    %v386 = vld [vmem:[%s1 + $0xb20] sm:$0xff]
    %v387 = vld [vmem:[%s1 + $0xb28] sm:$0xff]
    %v388 = vld [vmem:[%s1 + $0xb30] sm:$0xff]
    %v389 = vld [vmem:[%s1 + $0xb38] sm:$0xff]
    %v390 = vld [vmem:[%s1 + $0xb40] sm:$0xff]
    %v391 = vld [vmem:[%s1 + $0xb48] sm:$0xff]
    %v392 = vld [vmem:[%s1 + $0xb50] sm:$0xff]
    %v393 = vld [vmem:[%s1 + $0xb58] sm:$0xff]
    %v394 = vld [vmem:[%s1 + $0xb60] sm:$0xff]
    %v395 = vld [vmem:[%s1 + $0xb68] sm:$0xff]
    %v396 = vld [vmem:[%s1 + $0xb70] sm:$0xff]
    %v397 = vld [vmem:[%s1 + $0xb78] sm:$0xff]
    %v398 = vld [vmem:[%s1 + $0xb80] sm:$0xff]
    %v399 = vld [vmem:[%s1 + $0xb88] sm:$0xff]
    %v400 = vld [vmem:[%s1 + $0xb90] sm:$0xff]
    %v401 = vld [vmem:[%s1 + $0xb98] sm:$0xff]
    %v402 = vld [vmem:[%s1 + $0xba0] sm:$0xff]
    %v403 = vld [vmem:[%s1 + $0xba8] sm:$0xff]
    %v404 = vld [vmem:[%s1 + $0xbb0] sm:$0xff]
    %v405 = vld [vmem:[%s1 + $0xbb8] sm:$0xff]
    %v406 = vld [vmem:[%s1 + $0xbc0] sm:$0xff]
    %v407 = vld [vmem:[%s1 + $0xbc8] sm:$0xff]
    %v408 = vld [vmem:[%s1 + $0xbd0] sm:$0xff]
    %v409 = vld [vmem:[%s1 + $0xbd8] sm:$0xff]
    %v410 = vld [vmem:[%s1 + $0xbe0] sm:$0xff]
    %v411 = vld [vmem:[%s1 + $0xbe8] sm:$0xff]
    %v412 = vld [vmem:[%s1 + $0xbf0] sm:$0xff]
    %v413 = vld [vmem:[%s1 + $0xbf8] sm:$0xff]
    %v414 = vld [vmem:[%s2] sm:$0x1]
    %v416 = vperm.slane %v414, 0
    %424 = vst [vmem:[#allocation1] ss:$4 sm:$0xff] %v24
    %s425 = scalar_lea.vmem [#allocation1], 32
    %426 = vst [vmem:[%s425] ss:$4 sm:$0xff] %v25
    %v427 = vld.sshfl [vmem:[#allocation1] sm:$0xff pattern:$0x73625140]
    %v428 = vld.sshfl [vmem:[#allocation1 + $0x8] sm:$0xff pattern:$0x73625140]
    %v429 = vld.sshfl [vmem:[#allocation1 + $0x10] sm:$0xff pattern:$0x73625140]
    %v430 = vld.sshfl [vmem:[#allocation1 + $0x18] sm:$0xff pattern:$0x73625140]
    %v431 = vld.sshfl [vmem:[#allocation1 + $0x20] sm:$0xff pattern:$0x73625140]
    %v432 = vld.sshfl [vmem:[#allocation1 + $0x28] sm:$0xff pattern:$0x73625140]
    %v433 = vld.sshfl [vmem:[#allocation1 + $0x30] sm:$0xff pattern:$0x73625140]
    %v434 = vld.sshfl [vmem:[#allocation1 + $0x38] sm:$0xff pattern:$0x73625140]
    %435 = vst [vmem:[#allocation1] ss:$4 sm:$0xff] %v26
    %436 = vst [vmem:[%s425] ss:$4 sm:$0xff] %v27
    %v437 = vld.sshfl [vmem:[#allocation1] sm:$0xff pattern:$0x73625140]
    %v438 = vld.sshfl [vmem:[#allocation1 + $0x8] sm:$0xff pattern:$0x73625140]
    %v439 = vld.sshfl [vmem:[#allocation1 + $0x10] sm:$0xff pattern:$0x73625140]
    %v440 = vld.sshfl [vmem:[#allocation1 + $0x18] sm:$0xff pattern:$0x73625140]
    %v441 = vld.sshfl [vmem:[#allocation1 + $0x20] sm:$0xff pattern:$0x73625140]
    %v442 = vld.sshfl [vmem:[#allocation1 + $0x28] sm:$0xff pattern:$0x73625140]
    %v443 = vld.sshfl [vmem:[#allocation1 + $0x30] sm:$0xff pattern:$0x73625140]
    %v444 = vld.sshfl [vmem:[#allocation1 + $0x38] sm:$0xff pattern:$0x73625140]
    %445 = vst [vmem:[#allocation1] ss:$4 sm:$0xff] %v28
    %446 = vst [vmem:[%s425] ss:$4 sm:$0xff] %v29
    %v447 = vld.sshfl [vmem:[#allocation1] sm:$0xff pattern:$0x73625140]
    %v448 = vld.sshfl [vmem:[#allocation1 + $0x8] sm:$0xff pattern:$0x73625140]
    %v449 = vld.sshfl [vmem:[#allocation1 + $0x10] sm:$0xff pattern:$0x73625140]
    %v450 = vld.sshfl [vmem:[#allocation1 + $0x18] sm:$0xff pattern:$0x73625140]
    %v451 = vld.sshfl [vmem:[#allocation1 + $0x20] sm:$0xff pattern:$0x73625140]
    %v452 = vld.sshfl [vmem:[#allocation1 + $0x28] sm:$0xff pattern:$0x73625140]
    %v453 = vld.sshfl [vmem:[#allocation1 + $0x30] sm:$0xff pattern:$0x73625140]
    %v454 = vld.sshfl [vmem:[#allocation1 + $0x38] sm:$0xff pattern:$0x73625140]
    %479 = vmatpush.msra.mxu0 %v45
    %480 = vmatpush.msra.mxu0 %v44
    %481 = vmatpush.msra.mxu0 %v43
    %482 = vmatpush.msra.mxu0 %v42
    %483 = vmatpush.msra.mxu0 %v41
    %484 = vmatpush.msra.mxu0 %v40
    %485 = vmatpush.msra.mxu0 %v39
    %486 = vmatpush.msra.mxu0 %v38
    %487 = vmatpush.msra.mxu0 %v37
    %488 = vmatpush.msra.mxu0 %v36
    %489 = vmatpush.msra.mxu0 %v35
    %490 = vmatpush.msra.mxu0 %v34
    %491 = vmatpush.msra.mxu0 %v33
    %492 = vmatpush.msra.mxu0 %v32
    %493 = vmatpush.msra.mxu0 %v31
    %494 = vmatpush.msra.mxu0 %v30
    %495 = vmatmul.f32.gmra.mxu0 %v427
    %v496 = vpop.f32.mrf.mxu0
    %v497 = vadd.f32 %v416, %v496
    %498 = vdwg.mxu0
    %499 = vmatpush.msra.mxu0 %v61
    %500 = vmatpush.msra.mxu0 %v60
    %501 = vmatpush.msra.mxu0 %v59
    %502 = vmatpush.msra.mxu0 %v58
    %503 = vmatpush.msra.mxu0 %v57
    %504 = vmatpush.msra.mxu0 %v56
    %505 = vmatpush.msra.mxu0 %v55
    %506 = vmatpush.msra.mxu0 %v54
    %507 = vmatpush.msra.mxu0 %v53
    %508 = vmatpush.msra.mxu0 %v52
    %509 = vmatpush.msra.mxu0 %v51
    %510 = vmatpush.msra.mxu0 %v50
    %511 = vmatpush.msra.mxu0 %v49
    %512 = vmatpush.msra.mxu0 %v48
    %513 = vmatpush.msra.mxu0 %v47
    %514 = vmatpush.msra.mxu0 %v46
    %515 = vmatmul.f32.gmra.mxu0 %v428
    %v516 = vpop.f32.mrf.mxu0
    %v517 = vadd.f32 %v497, %v516
    %518 = vdwg.mxu0
    %519 = vmatpush.msra.mxu0 %v77
    %520 = vmatpush.msra.mxu0 %v76
    %521 = vmatpush.msra.mxu0 %v75
    %522 = vmatpush.msra.mxu0 %v74
    %523 = vmatpush.msra.mxu0 %v73
    %524 = vmatpush.msra.mxu0 %v72
    %525 = vmatpush.msra.mxu0 %v71
    %526 = vmatpush.msra.mxu0 %v70
    %527 = vmatpush.msra.mxu0 %v69
    %528 = vmatpush.msra.mxu0 %v68
    %529 = vmatpush.msra.mxu0 %v67
    %530 = vmatpush.msra.mxu0 %v66
    %531 = vmatpush.msra.mxu0 %v65
    %532 = vmatpush.msra.mxu0 %v64
    %533 = vmatpush.msra.mxu0 %v63
    %534 = vmatpush.msra.mxu0 %v62
    %535 = vmatmul.f32.gmra.mxu0 %v429
    %v536 = vpop.f32.mrf.mxu0
    %v537 = vadd.f32 %v517, %v536
    %538 = vdwg.mxu0
    %539 = vmatpush.msra.mxu0 %v93
    %540 = vmatpush.msra.mxu0 %v92
    %541 = vmatpush.msra.mxu0 %v91
    %542 = vmatpush.msra.mxu0 %v90
    %543 = vmatpush.msra.mxu0 %v89
    %544 = vmatpush.msra.mxu0 %v88
    %545 = vmatpush.msra.mxu0 %v87
    %546 = vmatpush.msra.mxu0 %v86
    %547 = vmatpush.msra.mxu0 %v85
    %548 = vmatpush.msra.mxu0 %v84
    %549 = vmatpush.msra.mxu0 %v83
    %550 = vmatpush.msra.mxu0 %v82
    %551 = vmatpush.msra.mxu0 %v81
    %552 = vmatpush.msra.mxu0 %v80
    %553 = vmatpush.msra.mxu0 %v79
    %554 = vmatpush.msra.mxu0 %v78
    %555 = vmatmul.f32.gmra.mxu0 %v430
    %v556 = vpop.f32.mrf.mxu0
    %v557 = vadd.f32 %v537, %v556
    %558 = vdwg.mxu0
    %559 = vmatpush.msra.mxu0 %v109
    %560 = vmatpush.msra.mxu0 %v108
    %561 = vmatpush.msra.mxu0 %v107
    %562 = vmatpush.msra.mxu0 %v106
    %563 = vmatpush.msra.mxu0 %v105
    %564 = vmatpush.msra.mxu0 %v104
    %565 = vmatpush.msra.mxu0 %v103
    %566 = vmatpush.msra.mxu0 %v102
    %567 = vmatpush.msra.mxu0 %v101
    %568 = vmatpush.msra.mxu0 %v100
    %569 = vmatpush.msra.mxu0 %v99
    %570 = vmatpush.msra.mxu0 %v98
    %571 = vmatpush.msra.mxu0 %v97
    %572 = vmatpush.msra.mxu0 %v96
    %573 = vmatpush.msra.mxu0 %v95
    %574 = vmatpush.msra.mxu0 %v94
    %575 = vmatmul.f32.gmra.mxu0 %v431
    %v576 = vpop.f32.mrf.mxu0
    %v577 = vadd.f32 %v557, %v576
    %578 = vdwg.mxu0
    %579 = vmatpush.msra.mxu0 %v125
    %580 = vmatpush.msra.mxu0 %v124
    %581 = vmatpush.msra.mxu0 %v123
    %582 = vmatpush.msra.mxu0 %v122
    %583 = vmatpush.msra.mxu0 %v121
    %584 = vmatpush.msra.mxu0 %v120
    %585 = vmatpush.msra.mxu0 %v119
    %586 = vmatpush.msra.mxu0 %v118
    %587 = vmatpush.msra.mxu0 %v117
    %588 = vmatpush.msra.mxu0 %v116
    %589 = vmatpush.msra.mxu0 %v115
    %590 = vmatpush.msra.mxu0 %v114
    %591 = vmatpush.msra.mxu0 %v113
    %592 = vmatpush.msra.mxu0 %v112
    %593 = vmatpush.msra.mxu0 %v111
    %594 = vmatpush.msra.mxu0 %v110
    %595 = vmatmul.f32.gmra.mxu0 %v432
    %v596 = vpop.f32.mrf.mxu0
    %v597 = vadd.f32 %v577, %v596
    %598 = vdwg.mxu0
    %599 = vmatpush.msra.mxu0 %v141
    %600 = vmatpush.msra.mxu0 %v140
    %601 = vmatpush.msra.mxu0 %v139
    %602 = vmatpush.msra.mxu0 %v138
    %603 = vmatpush.msra.mxu0 %v137
    %604 = vmatpush.msra.mxu0 %v136
    %605 = vmatpush.msra.mxu0 %v135
    %606 = vmatpush.msra.mxu0 %v134
    %607 = vmatpush.msra.mxu0 %v133
    %608 = vmatpush.msra.mxu0 %v132
    %609 = vmatpush.msra.mxu0 %v131
    %610 = vmatpush.msra.mxu0 %v130
    %611 = vmatpush.msra.mxu0 %v129
    %612 = vmatpush.msra.mxu0 %v128
    %613 = vmatpush.msra.mxu0 %v127
    %614 = vmatpush.msra.mxu0 %v126
    %615 = vmatmul.f32.gmra.mxu0 %v433
    %v616 = vpop.f32.mrf.mxu0
    %v617 = vadd.f32 %v597, %v616
    %618 = vdwg.mxu0
    %619 = vmatpush.msra.mxu0 %v157
    %620 = vmatpush.msra.mxu0 %v156
    %621 = vmatpush.msra.mxu0 %v155
    %622 = vmatpush.msra.mxu0 %v154
    %623 = vmatpush.msra.mxu0 %v153
    %624 = vmatpush.msra.mxu0 %v152
    %625 = vmatpush.msra.mxu0 %v151
    %626 = vmatpush.msra.mxu0 %v150
    %627 = vmatpush.msra.mxu0 %v149
    %628 = vmatpush.msra.mxu0 %v148
    %629 = vmatpush.msra.mxu0 %v147
    %630 = vmatpush.msra.mxu0 %v146
    %631 = vmatpush.msra.mxu0 %v145
    %632 = vmatpush.msra.mxu0 %v144
    %633 = vmatpush.msra.mxu0 %v143
    %634 = vmatpush.msra.mxu0 %v142
    %635 = vmatmul.f32.gmra.mxu0 %v434
    %v636 = vpop.f32.mrf.mxu0
    %v637 = vadd.f32 %v617, %v636
    %638 = vdwg.mxu0
    %639 = vmatpush.msra.mxu0 %v173
    %640 = vmatpush.msra.mxu0 %v172
    %641 = vmatpush.msra.mxu0 %v171
    %642 = vmatpush.msra.mxu0 %v170
    %643 = vmatpush.msra.mxu0 %v169
    %644 = vmatpush.msra.mxu0 %v168
    %645 = vmatpush.msra.mxu0 %v167
    %646 = vmatpush.msra.mxu0 %v166
    %647 = vmatpush.msra.mxu0 %v165
    %648 = vmatpush.msra.mxu0 %v164
    %649 = vmatpush.msra.mxu0 %v163
    %650 = vmatpush.msra.mxu0 %v162
    %651 = vmatpush.msra.mxu0 %v161
    %652 = vmatpush.msra.mxu0 %v160
    %653 = vmatpush.msra.mxu0 %v159
    %654 = vmatpush.msra.mxu0 %v158
    %655 = vmatmul.f32.gmra.mxu0 %v437
    %v656 = vpop.f32.mrf.mxu0
    %v657 = vadd.f32 %v637, %v656
    %658 = vdwg.mxu0
    %659 = vmatpush.msra.mxu0 %v189
    %660 = vmatpush.msra.mxu0 %v188
    %661 = vmatpush.msra.mxu0 %v187
    %662 = vmatpush.msra.mxu0 %v186
    %663 = vmatpush.msra.mxu0 %v185
    %664 = vmatpush.msra.mxu0 %v184
    %665 = vmatpush.msra.mxu0 %v183
    %666 = vmatpush.msra.mxu0 %v182
    %667 = vmatpush.msra.mxu0 %v181
    %668 = vmatpush.msra.mxu0 %v180
    %669 = vmatpush.msra.mxu0 %v179
    %670 = vmatpush.msra.mxu0 %v178
    %671 = vmatpush.msra.mxu0 %v177
    %672 = vmatpush.msra.mxu0 %v176
    %673 = vmatpush.msra.mxu0 %v175
    %674 = vmatpush.msra.mxu0 %v174
    %675 = vmatmul.f32.gmra.mxu0 %v438
    %v676 = vpop.f32.mrf.mxu0
    %v677 = vadd.f32 %v657, %v676
    %678 = vdwg.mxu0
    %679 = vmatpush.msra.mxu0 %v205
    %680 = vmatpush.msra.mxu0 %v204
    %681 = vmatpush.msra.mxu0 %v203
    %682 = vmatpush.msra.mxu0 %v202
    %683 = vmatpush.msra.mxu0 %v201
    %684 = vmatpush.msra.mxu0 %v200
    %685 = vmatpush.msra.mxu0 %v199
    %686 = vmatpush.msra.mxu0 %v198
    %687 = vmatpush.msra.mxu0 %v197
    %688 = vmatpush.msra.mxu0 %v196
    %689 = vmatpush.msra.mxu0 %v195
    %690 = vmatpush.msra.mxu0 %v194
    %691 = vmatpush.msra.mxu0 %v193
    %692 = vmatpush.msra.mxu0 %v192
    %693 = vmatpush.msra.mxu0 %v191
    %694 = vmatpush.msra.mxu0 %v190
    %695 = vmatmul.f32.gmra.mxu0 %v439
    %v696 = vpop.f32.mrf.mxu0
    %v697 = vadd.f32 %v677, %v696
    %698 = vdwg.mxu0
    %699 = vmatpush.msra.mxu0 %v221
    %700 = vmatpush.msra.mxu0 %v220
    %701 = vmatpush.msra.mxu0 %v219
    %702 = vmatpush.msra.mxu0 %v218
    %703 = vmatpush.msra.mxu0 %v217
    %704 = vmatpush.msra.mxu0 %v216
    %705 = vmatpush.msra.mxu0 %v215
    %706 = vmatpush.msra.mxu0 %v214
    %707 = vmatpush.msra.mxu0 %v213
    %708 = vmatpush.msra.mxu0 %v212
    %709 = vmatpush.msra.mxu0 %v211
    %710 = vmatpush.msra.mxu0 %v210
    %711 = vmatpush.msra.mxu0 %v209
    %712 = vmatpush.msra.mxu0 %v208
    %713 = vmatpush.msra.mxu0 %v207
    %714 = vmatpush.msra.mxu0 %v206
    %715 = vmatmul.f32.gmra.mxu0 %v440
    %v716 = vpop.f32.mrf.mxu0
    %v717 = vadd.f32 %v697, %v716
    %718 = vdwg.mxu0
    %719 = vmatpush.msra.mxu0 %v237
    %720 = vmatpush.msra.mxu0 %v236
    %721 = vmatpush.msra.mxu0 %v235
    %722 = vmatpush.msra.mxu0 %v234
    %723 = vmatpush.msra.mxu0 %v233
    %724 = vmatpush.msra.mxu0 %v232
    %725 = vmatpush.msra.mxu0 %v231
    %726 = vmatpush.msra.mxu0 %v230
    %727 = vmatpush.msra.mxu0 %v229
    %728 = vmatpush.msra.mxu0 %v228
    %729 = vmatpush.msra.mxu0 %v227
    %730 = vmatpush.msra.mxu0 %v226
    %731 = vmatpush.msra.mxu0 %v225
    %732 = vmatpush.msra.mxu0 %v224
    %733 = vmatpush.msra.mxu0 %v223
    %734 = vmatpush.msra.mxu0 %v222
    %735 = vmatmul.f32.gmra.mxu0 %v441
    %v736 = vpop.f32.mrf.mxu0
    %v737 = vadd.f32 %v717, %v736
    %738 = vdwg.mxu0
    %739 = vmatpush.msra.mxu0 %v253
    %740 = vmatpush.msra.mxu0 %v252
    %741 = vmatpush.msra.mxu0 %v251
    %742 = vmatpush.msra.mxu0 %v250
    %743 = vmatpush.msra.mxu0 %v249
    %744 = vmatpush.msra.mxu0 %v248
    %745 = vmatpush.msra.mxu0 %v247
    %746 = vmatpush.msra.mxu0 %v246
    %747 = vmatpush.msra.mxu0 %v245
    %748 = vmatpush.msra.mxu0 %v244
    %749 = vmatpush.msra.mxu0 %v243
    %750 = vmatpush.msra.mxu0 %v242
    %751 = vmatpush.msra.mxu0 %v241
    %752 = vmatpush.msra.mxu0 %v240
    %753 = vmatpush.msra.mxu0 %v239
    %754 = vmatpush.msra.mxu0 %v238
    %755 = vmatmul.f32.gmra.mxu0 %v442
    %v756 = vpop.f32.mrf.mxu0
    %v757 = vadd.f32 %v737, %v756
    %758 = vdwg.mxu0
    %759 = vmatpush.msra.mxu0 %v269
    %760 = vmatpush.msra.mxu0 %v268
    %761 = vmatpush.msra.mxu0 %v267
    %762 = vmatpush.msra.mxu0 %v266
    %763 = vmatpush.msra.mxu0 %v265
    %764 = vmatpush.msra.mxu0 %v264
    %765 = vmatpush.msra.mxu0 %v263
    %766 = vmatpush.msra.mxu0 %v262
    %767 = vmatpush.msra.mxu0 %v261
    %768 = vmatpush.msra.mxu0 %v260
    %769 = vmatpush.msra.mxu0 %v259
    %770 = vmatpush.msra.mxu0 %v258
    %771 = vmatpush.msra.mxu0 %v257
    %772 = vmatpush.msra.mxu0 %v256
    %773 = vmatpush.msra.mxu0 %v255
    %774 = vmatpush.msra.mxu0 %v254
    %775 = vmatmul.f32.gmra.mxu0 %v443
    %v776 = vpop.f32.mrf.mxu0
    %v777 = vadd.f32 %v757, %v776
    %778 = vdwg.mxu0
    %779 = vmatpush.msra.mxu0 %v285
    %780 = vmatpush.msra.mxu0 %v284
    %781 = vmatpush.msra.mxu0 %v283
    %782 = vmatpush.msra.mxu0 %v282
    %783 = vmatpush.msra.mxu0 %v281
    %784 = vmatpush.msra.mxu0 %v280
    %785 = vmatpush.msra.mxu0 %v279
    %786 = vmatpush.msra.mxu0 %v278
    %787 = vmatpush.msra.mxu0 %v277
    %788 = vmatpush.msra.mxu0 %v276
    %789 = vmatpush.msra.mxu0 %v275
    %790 = vmatpush.msra.mxu0 %v274
    %791 = vmatpush.msra.mxu0 %v273
    %792 = vmatpush.msra.mxu0 %v272
    %793 = vmatpush.msra.mxu0 %v271
    %794 = vmatpush.msra.mxu0 %v270
    %795 = vmatmul.f32.gmra.mxu0 %v444
    %v796 = vpop.f32.mrf.mxu0
    %v797 = vadd.f32 %v777, %v796
    %798 = vdwg.mxu0
    %799 = vmatpush.msra.mxu0 %v301
    %800 = vmatpush.msra.mxu0 %v300
    %801 = vmatpush.msra.mxu0 %v299
    %802 = vmatpush.msra.mxu0 %v298
    %803 = vmatpush.msra.mxu0 %v297
    %804 = vmatpush.msra.mxu0 %v296
    %805 = vmatpush.msra.mxu0 %v295
    %806 = vmatpush.msra.mxu0 %v294
    %807 = vmatpush.msra.mxu0 %v293
    %808 = vmatpush.msra.mxu0 %v292
    %809 = vmatpush.msra.mxu0 %v291
    %810 = vmatpush.msra.mxu0 %v290
    %811 = vmatpush.msra.mxu0 %v289
    %812 = vmatpush.msra.mxu0 %v288
    %813 = vmatpush.msra.mxu0 %v287
    %814 = vmatpush.msra.mxu0 %v286
    %815 = vmatmul.f32.gmra.mxu0 %v447
    %v816 = vpop.f32.mrf.mxu0
    %v817 = vadd.f32 %v797, %v816
    %818 = vdwg.mxu0
    %819 = vmatpush.msra.mxu0 %v317
    %820 = vmatpush.msra.mxu0 %v316
    %821 = vmatpush.msra.mxu0 %v315
    %822 = vmatpush.msra.mxu0 %v314
    %823 = vmatpush.msra.mxu0 %v313
    %824 = vmatpush.msra.mxu0 %v312
    %825 = vmatpush.msra.mxu0 %v311
    %826 = vmatpush.msra.mxu0 %v310
    %827 = vmatpush.msra.mxu0 %v309
    %828 = vmatpush.msra.mxu0 %v308
    %829 = vmatpush.msra.mxu0 %v307
    %830 = vmatpush.msra.mxu0 %v306
    %831 = vmatpush.msra.mxu0 %v305
    %832 = vmatpush.msra.mxu0 %v304
    %833 = vmatpush.msra.mxu0 %v303
    %834 = vmatpush.msra.mxu0 %v302
    %835 = vmatmul.f32.gmra.mxu0 %v448
    %v836 = vpop.f32.mrf.mxu0
    %v837 = vadd.f32 %v817, %v836
    %838 = vdwg.mxu0
    %839 = vmatpush.msra.mxu0 %v333
    %840 = vmatpush.msra.mxu0 %v332
    %841 = vmatpush.msra.mxu0 %v331
    %842 = vmatpush.msra.mxu0 %v330
    %843 = vmatpush.msra.mxu0 %v329
    %844 = vmatpush.msra.mxu0 %v328
    %845 = vmatpush.msra.mxu0 %v327
    %846 = vmatpush.msra.mxu0 %v326
    %847 = vmatpush.msra.mxu0 %v325
    %848 = vmatpush.msra.mxu0 %v324
    %849 = vmatpush.msra.mxu0 %v323
    %850 = vmatpush.msra.mxu0 %v322
    %851 = vmatpush.msra.mxu0 %v321
    %852 = vmatpush.msra.mxu0 %v320
    %853 = vmatpush.msra.mxu0 %v319
    %854 = vmatpush.msra.mxu0 %v318
    %855 = vmatmul.f32.gmra.mxu0 %v449
    %v856 = vpop.f32.mrf.mxu0
    %v857 = vadd.f32 %v837, %v856
    %858 = vdwg.mxu0
    %859 = vmatpush.msra.mxu0 %v349
    %860 = vmatpush.msra.mxu0 %v348
    %861 = vmatpush.msra.mxu0 %v347
    %862 = vmatpush.msra.mxu0 %v346
    %863 = vmatpush.msra.mxu0 %v345
    %864 = vmatpush.msra.mxu0 %v344
    %865 = vmatpush.msra.mxu0 %v343
    %866 = vmatpush.msra.mxu0 %v342
    %867 = vmatpush.msra.mxu0 %v341
    %868 = vmatpush.msra.mxu0 %v340
    %869 = vmatpush.msra.mxu0 %v339
    %870 = vmatpush.msra.mxu0 %v338
    %871 = vmatpush.msra.mxu0 %v337
    %872 = vmatpush.msra.mxu0 %v336
    %873 = vmatpush.msra.mxu0 %v335
    %874 = vmatpush.msra.mxu0 %v334
    %875 = vmatmul.f32.gmra.mxu0 %v450
    %v876 = vpop.f32.mrf.mxu0
    %v877 = vadd.f32 %v857, %v876
    %878 = vdwg.mxu0
    %879 = vmatpush.msra.mxu0 %v365
    %880 = vmatpush.msra.mxu0 %v364
    %881 = vmatpush.msra.mxu0 %v363
    %882 = vmatpush.msra.mxu0 %v362
    %883 = vmatpush.msra.mxu0 %v361
    %884 = vmatpush.msra.mxu0 %v360
    %885 = vmatpush.msra.mxu0 %v359
    %886 = vmatpush.msra.mxu0 %v358
    %887 = vmatpush.msra.mxu0 %v357
    %888 = vmatpush.msra.mxu0 %v356
    %889 = vmatpush.msra.mxu0 %v355
    %890 = vmatpush.msra.mxu0 %v354
    %891 = vmatpush.msra.mxu0 %v353
    %892 = vmatpush.msra.mxu0 %v352
    %893 = vmatpush.msra.mxu0 %v351
    %894 = vmatpush.msra.mxu0 %v350
    %895 = vmatmul.f32.gmra.mxu0 %v451
    %v896 = vpop.f32.mrf.mxu0
    %v897 = vadd.f32 %v877, %v896
    %898 = vdwg.mxu0
    %899 = vmatpush.msra.mxu0 %v381
    %900 = vmatpush.msra.mxu0 %v380
    %901 = vmatpush.msra.mxu0 %v379
    %902 = vmatpush.msra.mxu0 %v378
    %903 = vmatpush.msra.mxu0 %v377
    %904 = vmatpush.msra.mxu0 %v376
    %905 = vmatpush.msra.mxu0 %v375
    %906 = vmatpush.msra.mxu0 %v374
    %907 = vmatpush.msra.mxu0 %v373
    %908 = vmatpush.msra.mxu0 %v372
    %909 = vmatpush.msra.mxu0 %v371
    %910 = vmatpush.msra.mxu0 %v370
    %911 = vmatpush.msra.mxu0 %v369
    %912 = vmatpush.msra.mxu0 %v368
    %913 = vmatpush.msra.mxu0 %v367
    %914 = vmatpush.msra.mxu0 %v366
    %915 = vmatmul.f32.gmra.mxu0 %v452
    %v916 = vpop.f32.mrf.mxu0
    %v917 = vadd.f32 %v897, %v916
    %918 = vdwg.mxu0
    %919 = vmatpush.msra.mxu0 %v397
    %920 = vmatpush.msra.mxu0 %v396
    %921 = vmatpush.msra.mxu0 %v395
    %922 = vmatpush.msra.mxu0 %v394
    %923 = vmatpush.msra.mxu0 %v393
    %924 = vmatpush.msra.mxu0 %v392
    %925 = vmatpush.msra.mxu0 %v391
    %926 = vmatpush.msra.mxu0 %v390
    %927 = vmatpush.msra.mxu0 %v389
    %928 = vmatpush.msra.mxu0 %v388
    %929 = vmatpush.msra.mxu0 %v387
    %930 = vmatpush.msra.mxu0 %v386
    %931 = vmatpush.msra.mxu0 %v385
    %932 = vmatpush.msra.mxu0 %v384
    %933 = vmatpush.msra.mxu0 %v383
    %934 = vmatpush.msra.mxu0 %v382
    %935 = vmatmul.f32.gmra.mxu0 %v453
    %v936 = vpop.f32.mrf.mxu0
    %v937 = vadd.f32 %v917, %v936
    %938 = vdwg.mxu0
    %939 = vmatpush.msra.mxu0 %v413
    %940 = vmatpush.msra.mxu0 %v412
    %941 = vmatpush.msra.mxu0 %v411
    %942 = vmatpush.msra.mxu0 %v410
    %943 = vmatpush.msra.mxu0 %v409
    %944 = vmatpush.msra.mxu0 %v408
    %945 = vmatpush.msra.mxu0 %v407
    %946 = vmatpush.msra.mxu0 %v406
    %947 = vmatpush.msra.mxu0 %v405
    %948 = vmatpush.msra.mxu0 %v404
    %949 = vmatpush.msra.mxu0 %v403
    %950 = vmatpush.msra.mxu0 %v402
    %951 = vmatpush.msra.mxu0 %v401
    %952 = vmatpush.msra.mxu0 %v400
    %953 = vmatpush.msra.mxu0 %v399
    %954 = vmatpush.msra.mxu0 %v398
    %955 = vmatmul.f32.gmra.mxu0 %v454
    %v956 = vpop.f32.mrf.mxu0
    %v957 = vadd.f32 %v937, %v956
    %958 = vdwg.mxu0
    %v959 = vmax.f32 %v957, 0.0
    %v960 = vld [vmem:[%s3] sm:$0xff]
    %v961 = vld [vmem:[%s3 + $0x8] sm:$0xff]
    %v962 = vld [vmem:[%s3 + $0x10] sm:$0xff]
    %v963 = vld [vmem:[%s3 + $0x18] sm:$0xff]
    %vm964 = vcmask 261120
    %v966 = vsel %vm964, %v959, 0
    %968 = vmatpush.msra.mxu0 0.0
    %969 = vmatpush.msra.mxu0 0.0
    %970 = vmatpush.msra.mxu0 0.0
    %971 = vmatpush.msra.mxu0 0.0
    %972 = vmatpush.msra.mxu0 0.0
    %973 = vmatpush.msra.mxu0 0.0
    %974 = vmatpush.msra.mxu0 0.0
    %975 = vmatpush.msra.mxu0 0.0
    %976 = vmatpush.msra.mxu0 0.0
    %977 = vmatpush.msra.mxu0 0.0
    %978 = vmatpush.msra.mxu0 0.0
    %979 = vmatpush.msra.mxu0 0.0
    %980 = vmatpush.msra.mxu0 %v963
    %981 = vmatpush.msra.mxu0 %v962
    %982 = vmatpush.msra.mxu0 %v961
    %983 = vmatpush.msra.mxu0 %v960
    %984 = vmatmul.f32.gmra.mxu0 %v966
    %v985 = vpop.f32.mrf.mxu0
    %v986 = vadd.f32 0.0, %v985
    %987 = vdwg.mxu0
    %vm988 = vcmask 254976
    %v989 = vsel %vm988, %v986, 0.0
    %v990 = vrot.slane %v989, 4
    %v991 = vadd.f32 %v989, %v990
    %v992 = vrot.slane %v991, 2
    %v993 = vadd.f32 %v991, %v992
    %v994 = vrot.slane %v993, 1
    %v995 = vadd.f32 %v993, %v994
    %v996 = vrcp.pop 2.0
    %v997 = vmul.f32 2.0, %v996
    %v998 = vsub.f32 1.0, %v997
    %v999 = vmul.f32 %v996, %v998
    %v1000 = vadd.f32 %v996, %v999
    %vm1001 = vweird.f32 %v996
    %v1002 = vsel %vm1001, %v996, %v1000
    %v1003 = vmul.f32 %v995, %v1002
    %v1004 = vsub.f32 %v986, %v1003
    %v1005 = vmul.f32 %v1004, %v1004
    %v1006 = vsel %vm988, %v1005, 0.0
    %v1007 = vrot.slane %v1006, 4
    %v1008 = vadd.f32 %v1006, %v1007
    %v1009 = vrot.slane %v1008, 2
    %v1010 = vadd.f32 %v1008, %v1009
    %v1011 = vrot.slane %v1010, 1
    %v1012 = vadd.f32 %v1010, %v1011
    %v1013 = vmul.f32 %v1012, %v1002
    %v1014 = vadd.f32 %v1013, 1e-05
    %v1015 = vrsqrt.pop %v1014
    %v1016 = vmul.f32 %v1015, %v1014
    %v1017 = vmul.f32 %v1016, %v1015
    %v1018 = vmul.f32 0.5, %v1017
    %v1019 = vsub.f32 1.5, %v1018
    %v1020 = vmul.f32 %v1015, %v1019
    %vm1021 = vweird.f32 %v1014
    %vm1022 = vweird.f32 %v1015
    %vm1023 = vmor %vm1021, %vm1022
    %v1024 = vsel %vm1023, %v1015, %v1020
    %v1025 = vmul.f32 %v1024, 0.1
    %v1026 = vmul.f32 %v1004, %v1025
    %v1027 = vadd.f32 %v1026, %v957
    %v1028 = vmax.f32 %v1027, 0.0
    %v1030 = vsel %vm964, %v1028, 0
    %1032 = vmatpush.msra.mxu0 0.0
    %1033 = vmatpush.msra.mxu0 0.0
    %1034 = vmatpush.msra.mxu0 0.0
    %1035 = vmatpush.msra.mxu0 0.0
    %1036 = vmatpush.msra.mxu0 0.0
    %1037 = vmatpush.msra.mxu0 0.0
    %1038 = vmatpush.msra.mxu0 0.0
    %1039 = vmatpush.msra.mxu0 0.0
    %1040 = vmatpush.msra.mxu0 0.0
    %1041 = vmatpush.msra.mxu0 0.0
    %1042 = vmatpush.msra.mxu0 0.0
    %1043 = vmatpush.msra.mxu0 0.0
    %1044 = vmatpush.msra.mxu0 %v963
    %1045 = vmatpush.msra.mxu0 %v962
    %1046 = vmatpush.msra.mxu0 %v961
    %1047 = vmatpush.msra.mxu0 %v960
    %1048 = vmatmul.f32.gmra.mxu0 %v1030
    %v1049 = vpop.f32.mrf.mxu0
    %v1050 = vadd.f32 0.0, %v1049
    %1051 = vdwg.mxu0
    %v1052 = vsel %vm988, %v1050, 0.0
    %v1053 = vrot.slane %v1052, 4
    %v1054 = vadd.f32 %v1052, %v1053
    %v1055 = vrot.slane %v1054, 2
    %v1056 = vadd.f32 %v1054, %v1055
    %v1057 = vrot.slane %v1056, 1
    %v1058 = vadd.f32 %v1056, %v1057
    %v1059 = vmul.f32 %v1058, %v1002
    %v1060 = vsub.f32 %v1050, %v1059
    %v1061 = vmul.f32 %v1060, %v1060
    %v1062 = vsel %vm988, %v1061, 0.0
    %v1063 = vrot.slane %v1062, 4
    %v1064 = vadd.f32 %v1062, %v1063
    %v1065 = vrot.slane %v1064, 2
    %v1066 = vadd.f32 %v1064, %v1065
    %v1067 = vrot.slane %v1066, 1
    %v1068 = vadd.f32 %v1066, %v1067
    %v1069 = vmul.f32 %v1068, %v1002
    %v1070 = vadd.f32 %v1069, 1e-05
    %v1071 = vrsqrt.pop %v1070
    %v1072 = vmul.f32 %v1071, %v1070
    %v1073 = vmul.f32 %v1072, %v1071
    %v1074 = vmul.f32 0.5, %v1073
    %v1075 = vsub.f32 1.5, %v1074
    %v1076 = vmul.f32 %v1071, %v1075
    %vm1077 = vweird.f32 %v1070
    %vm1078 = vweird.f32 %v1071
    %vm1079 = vmor %vm1077, %vm1078
    %v1080 = vsel %vm1079, %v1071, %v1076
    %v1081 = vmul.f32 %v1080, 0.1
    %v1082 = vmul.f32 %v1060, %v1081
    %v1083 = vadd.f32 %v1082, %v1027
    %v1084 = vmax.f32 %v1083, 0.0
    %v1086 = vsel %vm964, %v1084, 0
    %1088 = vmatpush.msra.mxu0 0.0
    %1089 = vmatpush.msra.mxu0 0.0
    %1090 = vmatpush.msra.mxu0 0.0
    %1091 = vmatpush.msra.mxu0 0.0
    %1092 = vmatpush.msra.mxu0 0.0
    %1093 = vmatpush.msra.mxu0 0.0
    %1094 = vmatpush.msra.mxu0 0.0
    %1095 = vmatpush.msra.mxu0 0.0
    %1096 = vmatpush.msra.mxu0 0.0
    %1097 = vmatpush.msra.mxu0 0.0
    %1098 = vmatpush.msra.mxu0 0.0
    %1099 = vmatpush.msra.mxu0 0.0
    %1100 = vmatpush.msra.mxu0 %v963
    %1101 = vmatpush.msra.mxu0 %v962
    %1102 = vmatpush.msra.mxu0 %v961
    %1103 = vmatpush.msra.mxu0 %v960
    %1104 = vmatmul.f32.gmra.mxu0 %v1086
    %v1105 = vpop.f32.mrf.mxu0
    %v1106 = vadd.f32 0.0, %v1105
    %1107 = vdwg.mxu0
    %v1108 = vsel %vm988, %v1106, 0.0
    %v1109 = vrot.slane %v1108, 4
    %v1110 = vadd.f32 %v1108, %v1109
    %v1111 = vrot.slane %v1110, 2
    %v1112 = vadd.f32 %v1110, %v1111
    %v1113 = vrot.slane %v1112, 1
    %v1114 = vadd.f32 %v1112, %v1113
    %v1115 = vmul.f32 %v1114, %v1002
    %v1116 = vsub.f32 %v1106, %v1115
    %v1117 = vmul.f32 %v1116, %v1116
    %v1118 = vsel %vm988, %v1117, 0.0
    %v1119 = vrot.slane %v1118, 4
    %v1120 = vadd.f32 %v1118, %v1119
    %v1121 = vrot.slane %v1120, 2
    %v1122 = vadd.f32 %v1120, %v1121
    %v1123 = vrot.slane %v1122, 1
    %v1124 = vadd.f32 %v1122, %v1123
    %v1125 = vmul.f32 %v1124, %v1002
    %v1126 = vadd.f32 %v1125, 1e-05
    %v1127 = vrsqrt.pop %v1126
    %v1128 = vmul.f32 %v1127, %v1126
    %v1129 = vmul.f32 %v1128, %v1127
    %v1130 = vmul.f32 0.5, %v1129
    %v1131 = vsub.f32 1.5, %v1130
    %v1132 = vmul.f32 %v1127, %v1131
    %vm1133 = vweird.f32 %v1126
    %vm1134 = vweird.f32 %v1127
    %vm1135 = vmor %vm1133, %vm1134
    %v1136 = vsel %vm1135, %v1127, %v1132
    %v1137 = vmul.f32 %v1136, 0.1
    %v1138 = vmul.f32 %v1116, %v1137
    %v1139 = vadd.f32 %v1138, %v1083
    %v1140 = vmax.f32 %v1139, 0.0
    %v1142 = vsel %vm964, %v1140, 0
    %1144 = vmatpush.msra.mxu0 0.0
    %1145 = vmatpush.msra.mxu0 0.0
    %1146 = vmatpush.msra.mxu0 0.0
    %1147 = vmatpush.msra.mxu0 0.0
    %1148 = vmatpush.msra.mxu0 0.0
    %1149 = vmatpush.msra.mxu0 0.0
    %1150 = vmatpush.msra.mxu0 0.0
    %1151 = vmatpush.msra.mxu0 0.0
    %1152 = vmatpush.msra.mxu0 0.0
    %1153 = vmatpush.msra.mxu0 0.0
    %1154 = vmatpush.msra.mxu0 0.0
    %1155 = vmatpush.msra.mxu0 0.0
    %1156 = vmatpush.msra.mxu0 %v963
    %1157 = vmatpush.msra.mxu0 %v962
    %1158 = vmatpush.msra.mxu0 %v961
    %1159 = vmatpush.msra.mxu0 %v960
    %1160 = vmatmul.f32.gmra.mxu0 %v1142
    %v1161 = vpop.f32.mrf.mxu0
    %v1162 = vadd.f32 0.0, %v1161
    %1163 = vdwg.mxu0
    %v1164 = vsel %vm988, %v1162, 0.0
    %v1165 = vrot.slane %v1164, 4
    %v1166 = vadd.f32 %v1164, %v1165
    %v1167 = vrot.slane %v1166, 2
    %v1168 = vadd.f32 %v1166, %v1167
    %v1169 = vrot.slane %v1168, 1
    %v1170 = vadd.f32 %v1168, %v1169
    %v1171 = vmul.f32 %v1170, %v1002
    %v1172 = vsub.f32 %v1162, %v1171
    %v1173 = vmul.f32 %v1172, %v1172
    %v1174 = vsel %vm988, %v1173, 0.0
    %v1175 = vrot.slane %v1174, 4
    %v1176 = vadd.f32 %v1174, %v1175
    %v1177 = vrot.slane %v1176, 2
    %v1178 = vadd.f32 %v1176, %v1177
    %v1179 = vrot.slane %v1178, 1
    %v1180 = vadd.f32 %v1178, %v1179
    %v1181 = vmul.f32 %v1180, %v1002
    %v1182 = vadd.f32 %v1181, 1e-05
    %v1183 = vrsqrt.pop %v1182
    %v1184 = vmul.f32 %v1183, %v1182
    %v1185 = vmul.f32 %v1184, %v1183
    %v1186 = vmul.f32 0.5, %v1185
    %v1187 = vsub.f32 1.5, %v1186
    %v1188 = vmul.f32 %v1183, %v1187
    %vm1189 = vweird.f32 %v1182
    %vm1190 = vweird.f32 %v1183
    %vm1191 = vmor %vm1189, %vm1190
    %v1192 = vsel %vm1191, %v1183, %v1188
    %v1193 = vmul.f32 %v1192, 0.1
    %v1194 = vmul.f32 %v1172, %v1193
    %v1195 = vadd.f32 %v1194, %v1139
    %v1196 = vmax.f32 %v1195, 0.0
    %v1198 = vsel %vm964, %v1196, 0
    %1200 = vmatpush.msra.mxu0 0.0
    %1201 = vmatpush.msra.mxu0 0.0
    %1202 = vmatpush.msra.mxu0 0.0
    %1203 = vmatpush.msra.mxu0 0.0
    %1204 = vmatpush.msra.mxu0 0.0
    %1205 = vmatpush.msra.mxu0 0.0
    %1206 = vmatpush.msra.mxu0 0.0
    %1207 = vmatpush.msra.mxu0 0.0
    %1208 = vmatpush.msra.mxu0 0.0
    %1209 = vmatpush.msra.mxu0 0.0
    %1210 = vmatpush.msra.mxu0 0.0
    %1211 = vmatpush.msra.mxu0 0.0
    %1212 = vmatpush.msra.mxu0 %v963
    %1213 = vmatpush.msra.mxu0 %v962
    %1214 = vmatpush.msra.mxu0 %v961
    %1215 = vmatpush.msra.mxu0 %v960
    %1216 = vmatmul.f32.gmra.mxu0 %v1198
    %v1217 = vpop.f32.mrf.mxu0
    %v1218 = vadd.f32 0.0, %v1217
    %1219 = vdwg.mxu0
    %v1220 = vsel %vm988, %v1218, 0.0
    %v1221 = vrot.slane %v1220, 4
    %v1222 = vadd.f32 %v1220, %v1221
    %v1223 = vrot.slane %v1222, 2
    %v1224 = vadd.f32 %v1222, %v1223
    %v1225 = vrot.slane %v1224, 1
    %v1226 = vadd.f32 %v1224, %v1225
    %v1227 = vmul.f32 %v1226, %v1002
    %v1228 = vsub.f32 %v1218, %v1227
    %v1229 = vmul.f32 %v1228, %v1228
    %v1230 = vsel %vm988, %v1229, 0.0
    %v1231 = vrot.slane %v1230, 4
    %v1232 = vadd.f32 %v1230, %v1231
    %v1233 = vrot.slane %v1232, 2
    %v1234 = vadd.f32 %v1232, %v1233
    %v1235 = vrot.slane %v1234, 1
    %v1236 = vadd.f32 %v1234, %v1235
    %v1237 = vmul.f32 %v1236, %v1002
    %v1238 = vadd.f32 %v1237, 1e-05
    %v1239 = vrsqrt.pop %v1238
    %v1240 = vmul.f32 %v1239, %v1238
    %v1241 = vmul.f32 %v1240, %v1239
    %v1242 = vmul.f32 0.5, %v1241
    %v1243 = vsub.f32 1.5, %v1242
    %v1244 = vmul.f32 %v1239, %v1243
    %vm1245 = vweird.f32 %v1238
    %vm1246 = vweird.f32 %v1239
    %vm1247 = vmor %vm1245, %vm1246
    %v1248 = vsel %vm1247, %v1239, %v1244
    %v1249 = vmul.f32 %v1248, 0.1
    %v1250 = vmul.f32 %v1228, %v1249
    %v1251 = vadd.f32 %v1250, %v1195
    %v1252 = vmax.f32 %v1251, 0.0
    %v1253 = vld [vmem:[%s4] sm:$0xff]
    %v1254 = vld [vmem:[%s4 + $0x8] sm:$0xff]
    %v1255 = vld [vmem:[%s4 + $0x10] sm:$0xff]
    %v1256 = vld [vmem:[%s4 + $0x18] sm:$0xff]
    %v1257 = vld [vmem:[%s5] sm:$0x1]
    %v1259 = vperm.slane %v1257, 0
    %v1262 = vsel %vm964, %v1252, 0
    %1264 = vmatpush.msra.mxu0 0.0
    %1265 = vmatpush.msra.mxu0 0.0
    %1266 = vmatpush.msra.mxu0 0.0
    %1267 = vmatpush.msra.mxu0 0.0
    %1268 = vmatpush.msra.mxu0 0.0
    %1269 = vmatpush.msra.mxu0 0.0
    %1270 = vmatpush.msra.mxu0 0.0
    %1271 = vmatpush.msra.mxu0 0.0
    %1272 = vmatpush.msra.mxu0 0.0
    %1273 = vmatpush.msra.mxu0 0.0
    %1274 = vmatpush.msra.mxu0 0.0
    %1275 = vmatpush.msra.mxu0 0.0
    %1276 = vmatpush.msra.mxu0 %v1256
    %1277 = vmatpush.msra.mxu0 %v1255
    %1278 = vmatpush.msra.mxu0 %v1254
    %1279 = vmatpush.msra.mxu0 %v1253
    %1280 = vmatmul.f32.gmra.mxu0 %v1262
    %v1281 = vpop.f32.mrf.mxu0
    %v1282 = vadd.f32 %v1259, %v1281
    %1283 = vdwg.mxu0
    %1284 = vst [vmem:[#allocation2] sm:$0x3] %v1282
    // Predicated region
    $region26: #{net3fcbrc_forward.1} parent=1 // pred_check
      _
    $region27: #{net3fcbrc_forward.1} parent=1 // pred_check_branch
      %1286 = sbr.rel (0) target = $region29
    $region28: #{net3fcbrc_forward.1} parent=1 // pred_region
      %1288 = vsyncadd [#allocation3], 0
      %s1290 = sshll.u32 [#allocation2], 4
      %s1291 = int_to_ptr.vmem [resolvable:$true] %s1290
      %s1292 = sshll.u32 %s6, 4
      %s1293 = int_to_ptr.hbm [resolvable:$true] %s1292
      %1295 = dma.vmem_to_hbm [thread:$0]  %s1291, 32, %s1293, [#allocation3]
    $region29: #{net3fcbrc_forward.1} parent=1 // pred_fallthru
      _
    // Predicated region
    $region30: #{net3fcbrc_forward.1} parent=1 // pred_check
      _
    $region31: #{net3fcbrc_forward.1} parent=1 // pred_check_branch
      %1297 = sbr.rel (0) target = $region33
    $region32: #{net3fcbrc_forward.1} parent=1 // pred_region
      %1299 = dma.done [#allocation3], 32
    $region33: #{net3fcbrc_forward.1} parent=1 // pred_fallthru
      _
    %1300 = vsyncpa [#allocation3], 1

</llo_original>
